<compile_context>
chip_gen: v5e
topology: v5e:2x2
jax: 0.10.0
libtpu: 0.0.40
codegen_flags: <defaults>
</compile_context>

<pallas_src>
import jax
import jax.numpy as jnp
from jax.experimental import pallas as pl
from jax.experimental.pallas import tpu as pltpu


def _priori_rank_kernel(snum_ref, x_ref, wq_ref, bq_ref, wkt_ref, bk_ref, out_ref):
    """One grid step processes TB batch rows.

    snum_ref: [TB, 1, 1] int32  sentence_num for this block's batch rows
    x_ref:    [TB, S, H]        hidden states (bf16 preferred; dtype-agnostic)
    wq_ref:   [H, O]     bf16   query_linear weight (laid out for x @ W)
    bq_ref:   [1, O]     f32    query_linear bias
    wkt_ref:  [O, H]     bf16   key_linear weight, transposed (for q @ Wk^T)
    bk_ref:   [1, O]     f32    key_linear bias
    out_ref:  [TB, S, 1] f32    softmax(scores.unsqueeze(-1), dim=-1)
    """
    TB, S, H = x_ref.shape

    x = x_ref[...]                                        # input dtype, no upcast
    n3 = snum_ref[...]                                    # [TB, 1, 1] int32
    n_f = n3[:, :, 0].astype(jnp.float32)                 # [TB, 1]

    # Masked mean over the sentence axis: mask in input dtype, accumulate f32.
    col3 = jax.lax.broadcasted_iota(jnp.int32, (TB, S, 1), 1)
    keep = n3 > col3                                      # [TB, S, 1] bool
    masked = jnp.where(keep, x, jnp.zeros((), x.dtype))   # [TB, S, H]
    avg = jnp.sum(masked, axis=1, dtype=jnp.float32) / n_f           # [TB, H]

    # query = avg @ Wq + bq   (MXU, bf16 operands, f32 accumulation).
    query = jnp.dot(avg.astype(jnp.bfloat16), wq_ref[...],
                    preferred_element_type=jnp.float32) + bq_ref[...]  # [TB, O]

    # Key projection contracted away:
    #   scores[b,s] = x[b,s,:] . (Wk @ query[b]) + bk . query[b]
    v = jnp.dot(query.astype(jnp.bfloat16), wkt_ref[...],
                preferred_element_type=jnp.float32)                    # [TB, H]
    bk_dot_q = jnp.sum(bk_ref[...] * query, axis=-1, keepdims=True)    # [TB, 1]

    # <x, v> per (b, s): VPU multiply (input dtype) + lane reduce (f32 acc).
    prod = x * v.astype(x.dtype)[:, None, :]                            # [TB, S, H]
    scores = jnp.sum(prod, axis=-1, keepdims=True, dtype=jnp.float32)   # [TB, S, 1]
    scores = scores + bk_dot_q[:, None, :]                              # [TB, S, 1]
    # (The reference's "(1-mask) * -2000" add is dropped: a finite constant
    #  cannot change finiteness, and the size-1 softmax maps finite -> 1.0.)

    # softmax(scores.unsqueeze(-1), dim=-1): softmax axis has size 1, so the
    # result is exp(0)/exp(0) == 1.0; kept literal so NaN/Inf still propagate.
    # TODO(synk): the reference softmax axis is the degenerate size-1 axis; if
    # the sentence axis was intended, masking & bf16 precision need review.
    e = jnp.exp(scores - scores)
    out_ref[...] = e / e


def _build_call(B, TB, S, H, O, vmem_limit_bytes, single_buffer_weights):
    if single_buffer_weights:
        def wspec(shape):
            # Grid-invariant operands: constant index_map + single buffer.
            return pl.BlockSpec(shape, lambda b, _n=len(shape): (0,) * _n,
                                pipeline_mode=pl.Buffered(1))
    else:
        def wspec(shape):
            return pl.BlockSpec(shape, lambda b, _n=len(shape): (0,) * _n)

    cp_kwargs = dict(dimension_semantics=("parallel",))
    if vmem_limit_bytes is not None:
        cp_kwargs["vmem_limit_bytes"] = int(vmem_limit_bytes)

    return pl.pallas_call(
        _priori_rank_kernel,
        out_shape=jax.ShapeDtypeStruct((B, S, 1), jnp.float32),
        grid=(pl.cdiv(B, TB),),
        in_specs=[
            pl.BlockSpec((TB, 1, 1), lambda b: (b, 0, 0)),   # sentence_num
            pl.BlockSpec((TB, S, H), lambda b: (b, 0, 0)),   # hidden states
            wspec((H, O)),                                   # Wq   (bf16)
            wspec((1, O)),                                   # bq   (f32)
            wspec((O, H)),                                   # Wk^T (bf16)
            wspec((1, O)),                                   # bk   (f32)
        ],
        out_specs=pl.BlockSpec((TB, S, 1), lambda b: (b, 0, 0)),
        compiler_params=pltpu.CompilerParams(**cp_kwargs),
    )


def _tiling_params(x_dtype, row_target, vmem_limit_bytes):
    """Generation-aware tile-rows target and scoped-VMEM limit."""
    kind = ""
    try:
        kind = jax.devices()[0].device_kind.lower()
    except Exception:
        pass
    is_v7 = ("v7" in kind) or ("tpu7" in kind)
    if "v5" in kind:          # v5e/v5p: 16 MiB scoped-VMEM default -> raise it
        rt, vl = 4096, 64 << 20
    elif is_v7:               # v7x: 64 MiB physical VMEM per TensorCore
        rt, vl = 4096, 48 << 20
    elif "v6" in kind:        # v6e: 128 MiB physical VMEM
        rt, vl = 8192, 96 << 20
    else:                     # unknown: stay inside the default scoped VMEM
        rt, vl = 2048, None
    if row_target is None:
        row_target = rt
    if vmem_limit_bytes is None:
        vmem_limit_bytes = vl
    if jnp.dtype(x_dtype).itemsize >= 4:   # f32 hidden states: halve the x tile
        row_target = max(1, row_target // 2)
    return row_target, vmem_limit_bytes, is_v7


def priori_rank_net(all_sentence_hidden, sentence_num, wq, bq, wk, bk, *,
                    row_target=None, vmem_limit_bytes=None):
    """all_sentence_hidden: [B, S, 768] (bf16 preferred), sentence_num: [B] int.

    Returns softmax(scores.unsqueeze(-1), dim=-1): [B, S, 1, 1] f32.
    """
    B, S, H = all_sentence_hidden.shape
    O = wq.shape[1]
    assert H == 768 and O == 512

    row_target, vmem_limit_bytes, want_two_cores = _tiling_params(
        all_sentence_hidden.dtype, row_target, vmem_limit_bytes)

    # TB batch rows per grid step (~row_target total rows per step).  The batch
    # axis is blocked directly; Pallas masks the ragged last block, so no
    # jnp.pad / reshape copy of x ever hits HBM.
    TB = min(B, max(1, row_target // S))
    if want_two_cores and B > 1 and pl.cdiv(B, TB) < 2:
        TB = pl.cdiv(B, 2)    # v7x: >= 2 grid steps so both TensorCores work

    snum3 = jnp.asarray(sentence_num, jnp.int32).reshape(B, 1, 1)

    # Weights: one-time tiny (<1.5 MiB) bf16 casts / transpose; x is NOT cast.
    wq_bf = jnp.asarray(wq, jnp.bfloat16)
    wkt_bf = jnp.asarray(wk, jnp.bfloat16).T            # [O, H] for q @ Wk^T
    bq2 = jnp.asarray(bq, jnp.float32).reshape(1, O)
    bk2 = jnp.asarray(bk, jnp.float32).reshape(1, O)

    args = (snum3, all_sentence_hidden, wq_bf, bq2, wkt_bf, bk2)
    try:
        out3 = _build_call(B, TB, S, H, O, vmem_limit_bytes, True)(*args)
    except (TypeError, NotImplementedError, AttributeError):
        # pipeline_mode=pl.Buffered(1) unavailable in this jax: default buffering.
        out3 = _build_call(B, TB, S, H, O, vmem_limit_bytes, False)(*args)

    # Reference returns softmax(scores.unsqueeze(-1), dim=-1): [B, S, 1, 1].
    return out3.reshape(B, S, 1, 1)


def _reference(all_sentence_hidden, sentence_num, wq, bq, wk, bk):
    """Pure-JAX transcription of the PyTorch forward (for validation)."""
    x = all_sentence_hidden.astype(jnp.float32)
    B, S, H = x.shape
    compare = jnp.arange(S)[None, :]                               # [1, S]
    n = sentence_num.astype(jnp.float32)
    mask = (sentence_num[:, None] > compare).astype(jnp.float32)   # [B, S]
    mask_num = (1.0 - mask) * -2000.0                              # [B, S]
    masked = x * mask[..., None]                                   # [B, S, H]
    avg = masked.sum(axis=1) / n[:, None]                          # [B, H]
    query = avg @ wq + bq[None, :]                                 # [B, 512]
    key = x @ wk + bk[None, None, :]                               # [B, S, 512]
    scores = jnp.einsum("bsd,bd->bs", key, query) + mask_num       # [B, S]
    return jax.nn.softmax(scores[..., None, None], axis=-1)        # [B, S, 1, 1]


if __name__ == "__main__":
    B, S, H, O = 2, 8, 768, 512

    key0 = jax.random.PRNGKey(0)
    kx, kq, kbq, kk, kbk = jax.random.split(key0, 5)

    # Deterministic synthetic nn.Linear(768, 512) x 2 params, stored transposed.
    bound = 1.0 / (H ** 0.5)
    wq = jax.random.uniform(kq, (H, O), jnp.float32, -bound, bound)
    bq = jax.random.uniform(kbq, (O,), jnp.float32, -bound, bound)
    wk = jax.random.uniform(kk, (H, O), jnp.float32, -bound, bound)
    bk = jax.random.uniform(kbk, (O,), jnp.float32, -bound, bound)

    # Producer emits bf16 hidden states (kept bf16 end-to-end; the wrapper and
    # kernel never upcast the full tensor).
    all_sentence_hidden = jax.random.normal(kx, (B, S, H), jnp.float32).astype(jnp.bfloat16)
    sentence_num = jnp.array([5, 8], dtype=jnp.int32)              # max == S

    out = priori_rank_net(all_sentence_hidden, sentence_num, wq, bq, wk, bk)
    out = jax.block_until_ready(out)

    ref = _reference(all_sentence_hidden, sentence_num, wq, bq, wk, bk)
    assert out.shape == (B, S, 1, 1), out.shape
    assert bool(jnp.allclose(out, ref, atol=1e-5, rtol=1e-5)), "mismatch vs JAX reference"

    print("KERNEL_OK")
</pallas_src>

<mosaic_0001>
module attributes {stable_mosaic.version = 11 : i64} {
  func.func @_priori_rank_kernel(%arg0: i32, %arg1: memref<2x1x1xi32, #tpu.memory_space<vmem>>, %arg2: memref<2x8x768xbf16, #tpu.memory_space<vmem>>, %arg3: memref<768x512xbf16, #tpu.memory_space<vmem>>, %arg4: memref<1x512xf32, #tpu.memory_space<vmem>>, %arg5: memref<512x768xbf16, #tpu.memory_space<vmem>>, %arg6: memref<1x512xf32, #tpu.memory_space<vmem>>, %arg7: memref<2x8x1xf32, #tpu.memory_space<vmem>>) attributes {dimension_semantics = [#tpu.dimension_semantics<parallel>], iteration_bounds = array<i64: 1>, scalar_prefetch = 0 : i64, scratch_operands = 0 : i64, tpu.core_type = #tpu.core_type<tc>, window_params = [{transform_indices = @transform_0, window_bounds = array<i64: 2, 1, 1>}, {transform_indices = @transform_1, window_bounds = array<i64: 2, 8, 768>}, {pipeline_mode = #tpu.pipeline_mode<synchronous>, transform_indices = @transform_2, window_bounds = array<i64: 768, 512>}, {pipeline_mode = #tpu.pipeline_mode<synchronous>, transform_indices = @transform_3, window_bounds = array<i64: 1, 512>}, {pipeline_mode = #tpu.pipeline_mode<synchronous>, transform_indices = @transform_4, window_bounds = array<i64: 512, 768>}, {pipeline_mode = #tpu.pipeline_mode<synchronous>, transform_indices = @transform_5, window_bounds = array<i64: 1, 512>}, {transform_indices = @transform_6, window_bounds = array<i64: 2, 8, 1>}]} {
    %c0 = arith.constant 0 : index
    %c0_0 = arith.constant 0 : index
    %c0_1 = arith.constant 0 : index
    %0 = vector.load %arg2[%c0, %c0_0, %c0_1] : memref<2x8x768xbf16, #tpu.memory_space<vmem>>, vector<2x8x768xbf16>
    %c0_2 = arith.constant 0 : index
    %c0_3 = arith.constant 0 : index
    %c0_4 = arith.constant 0 : index
    %1 = vector.load %arg1[%c0_2, %c0_3, %c0_4] : memref<2x1x1xi32, #tpu.memory_space<vmem>>, vector<2x1x1xi32>
    %2 = vector.shape_cast %1 : vector<2x1x1xi32> to vector<2x1xi32>
    %3 = arith.sitofp %2 : vector<2x1xi32> to vector<2x1xf32>
    %4 = tpu.iota {dimensions = array<i32: 1>} : vector<2x8x1xi32>
    %5 = vector.broadcast %1 : vector<2x1x1xi32> to vector<2x8x1xi32>
    %6 = arith.cmpi sgt, %5, %4 : vector<2x8x1xi32>
    %cst = arith.constant 0.000000e+00 : bf16
    %7 = vector.shape_cast %6 : vector<2x8x1xi1> to vector<2x8x1xi1>
    %8 = vector.broadcast %7 : vector<2x8x1xi1> to vector<2x8x768xi1>
    %9 = vector.broadcast %cst : bf16 to vector<2x8x768xbf16>
    %10 = arith.select %8, %0, %9 : vector<2x8x768xi1>, vector<2x8x768xbf16>
    %11 = arith.extf %10 : vector<2x8x768xbf16> to vector<2x8x768xf32>
    %cst_5 = arith.constant dense<0.000000e+00> : vector<2x768xf32>
    %12 = vector.multi_reduction <add>, %11, %cst_5 [1] : vector<2x8x768xf32> to vector<2x768xf32>
    %13 = vector.broadcast %3 : vector<2x1xf32> to vector<2x768xf32>
    %14 = arith.divf %12, %13 : vector<2x768xf32>
    %15 = arith.truncf %14 : vector<2x768xf32> to vector<2x768xbf16>
    %c0_6 = arith.constant 0 : index
    %c0_7 = arith.constant 0 : index
    %16 = vector.load %arg3[%c0_6, %c0_7] : memref<768x512xbf16, #tpu.memory_space<vmem>>, vector<768x512xbf16>
    %cst_8 = arith.constant dense<0.000000e+00> : vector<2x512xf32>
    %17 = tpu.matmul %15, %16, %cst_8 {dimension_numbers = #tpu.dot_dimension_numbers<[1], [0], [0], [1], [0, 0, 1, 1], [], []>} : vector<2x768xbf16>, vector<768x512xbf16>, vector<2x512xf32> -> vector<2x512xf32>
    %c0_9 = arith.constant 0 : index
    %c0_10 = arith.constant 0 : index
    %18 = vector.load %arg4[%c0_9, %c0_10] : memref<1x512xf32, #tpu.memory_space<vmem>>, vector<1x512xf32>
    %19 = vector.broadcast %18 : vector<1x512xf32> to vector<2x512xf32>
    %20 = arith.addf %17, %19 : vector<2x512xf32>
    %21 = arith.truncf %20 : vector<2x512xf32> to vector<2x512xbf16>
    %c0_11 = arith.constant 0 : index
    %c0_12 = arith.constant 0 : index
    %22 = vector.load %arg5[%c0_11, %c0_12] : memref<512x768xbf16, #tpu.memory_space<vmem>>, vector<512x768xbf16>
    %cst_13 = arith.constant dense<0.000000e+00> : vector<2x768xf32>
    %23 = tpu.matmul %21, %22, %cst_13 {dimension_numbers = #tpu.dot_dimension_numbers<[1], [0], [0], [1], [0, 0, 1, 1], [], []>} : vector<2x512xbf16>, vector<512x768xbf16>, vector<2x768xf32> -> vector<2x768xf32>
    %c0_14 = arith.constant 0 : index
    %c0_15 = arith.constant 0 : index
    %24 = vector.load %arg6[%c0_14, %c0_15] : memref<1x512xf32, #tpu.memory_space<vmem>>, vector<1x512xf32>
    %25 = vector.broadcast %24 : vector<1x512xf32> to vector<2x512xf32>
    %26 = arith.mulf %25, %20 : vector<2x512xf32>
    %cst_16 = arith.constant dense<0.000000e+00> : vector<2xf32>
    %27 = vector.multi_reduction <add>, %26, %cst_16 [1] : vector<2x512xf32> to vector<2xf32>
    %28 = vector.shape_cast %27 : vector<2xf32> to vector<2x1xf32>
    %29 = arith.truncf %23 : vector<2x768xf32> to vector<2x768xbf16>
    %30 = vector.shape_cast %29 : vector<2x768xbf16> to vector<2x1x768xbf16>
    %31 = vector.broadcast %30 : vector<2x1x768xbf16> to vector<2x8x768xbf16>
    %32 = arith.mulf %0, %31 : vector<2x8x768xbf16>
    %33 = arith.extf %32 : vector<2x8x768xbf16> to vector<2x8x768xf32>
    %cst_17 = arith.constant dense<0.000000e+00> : vector<2x8xf32>
    %34 = vector.multi_reduction <add>, %33, %cst_17 [2] : vector<2x8x768xf32> to vector<2x8xf32>
    %35 = vector.shape_cast %34 : vector<2x8xf32> to vector<2x8x1xf32>
    %36 = vector.shape_cast %28 : vector<2x1xf32> to vector<2x1x1xf32>
    %37 = vector.broadcast %36 : vector<2x1x1xf32> to vector<2x8x1xf32>
    %38 = arith.addf %35, %37 : vector<2x8x1xf32>
    %39 = arith.subf %38, %38 : vector<2x8x1xf32>
    %40 = math.exp %39 : vector<2x8x1xf32>
    %41 = arith.divf %40, %40 : vector<2x8x1xf32>
    %c0_18 = arith.constant 0 : index
    %c0_19 = arith.constant 0 : index
    %c0_20 = arith.constant 0 : index
    %42 = vector.load %arg7[%c0_18, %c0_19, %c0_20] : memref<2x8x1xf32, #tpu.memory_space<vmem>>, vector<2x8x1xf32>
    tpu.vector_store %arg7[%c0_18, %c0_19, %c0_20], %41 {strides = array<i32>} : memref<2x8x1xf32, #tpu.memory_space<vmem>>, vector<2x8x1xf32>,
    return
  }
  func.func @transform_0(%arg0: i32) -> (i32, i32, i32) {
    %c0_i32 = arith.constant 0 : i32
    %c0_i32_0 = arith.constant 0 : i32
    %c0_i32_1 = arith.constant 0 : i32
    return %arg0, %c0_i32, %c0_i32_0 : i32, i32, i32
  }
  func.func @transform_1(%arg0: i32) -> (i32, i32, i32) {
    %c0_i32 = arith.constant 0 : i32
    %c0_i32_0 = arith.constant 0 : i32
    %c0_i32_1 = arith.constant 0 : i32
    return %arg0, %c0_i32, %c0_i32_0 : i32, i32, i32
  }
  func.func @transform_2(%arg0: i32) -> (i32, i32) {
    %c0_i32 = arith.constant 0 : i32
    %c0_i32_0 = arith.constant 0 : i32
    %c0_i32_1 = arith.constant 0 : i32
    return %c0_i32, %c0_i32_0 : i32, i32
  }
  func.func @transform_3(%arg0: i32) -> (i32, i32) {
    %c0_i32 = arith.constant 0 : i32
    %c0_i32_0 = arith.constant 0 : i32
    %c0_i32_1 = arith.constant 0 : i32
    return %c0_i32, %c0_i32_0 : i32, i32
  }
  func.func @transform_4(%arg0: i32) -> (i32, i32) {
    %c0_i32 = arith.constant 0 : i32
    %c0_i32_0 = arith.constant 0 : i32
    %c0_i32_1 = arith.constant 0 : i32
    return %c0_i32, %c0_i32_0 : i32, i32
  }
  func.func @transform_5(%arg0: i32) -> (i32, i32) {
    %c0_i32 = arith.constant 0 : i32
    %c0_i32_0 = arith.constant 0 : i32
    %c0_i32_1 = arith.constant 0 : i32
    return %c0_i32, %c0_i32_0 : i32, i32
  }
  func.func @transform_6(%arg0: i32) -> (i32, i32, i32) {
    %c0_i32 = arith.constant 0 : i32
    %c0_i32_0 = arith.constant 0 : i32
    %c0_i32_1 = arith.constant 0 : i32
    return %arg0, %c0_i32, %c0_i32_0 : i32, i32, i32
  }
}

</mosaic_0001>

<llo_original>
// kernel: tpu_custom_call.1
$region0: #{tpu_custom_call.1}
  #allocation0 [shape = 'u32[]', space=smem, size = 0x4, offset = 0x4, fixed_abs, tag = 'smem constant byte address 0x4 - core index']
  #allocation1 [shape = 'u32[72,128]{1,0:T(1,128)}', space=vmem, size = 0x9000, scoped, tag = 'internal scratch']
  %s0 = inlined_call_operand.vmem [shape: s32[2,1,1], index: 0, kind: input, shape index: {}]
  %s1 = inlined_call_operand.hbm [shape: bf16[2,8,768], index: 1, kind: input, shape index: {}]
  %s2 = inlined_call_operand.hbm [shape: bf16[768,512], index: 2, kind: input, shape index: {}]
  %s3 = inlined_call_operand.vmem [shape: f32[1,512], index: 3, kind: input, shape index: {}]
  %s4 = inlined_call_operand.hbm [shape: bf16[512,768], index: 4, kind: input, shape index: {}]
  %s5 = inlined_call_operand.hbm [shape: f32[1,512], index: 5, kind: input, shape index: {}]
  %s6 = inlined_call_operand.vmem [shape: f32[2,8,1], index: 6, kind: output, shape index: {}]
  %s7 = sld [smem:[#allocation0]]
  $region50: #{tpu_custom_call.1} parent=0
    _
  %s9 = ssub.s32 1, %s7
  %s10 = scalar_select 0, %s9, %s7
  $region1: #{tpu_custom_call.1} parent=0
    #allocation2 [shape = 'u8[24576]{0}', space=vmem, size = 0x6000, scoped, tag = 'input window, operand 1, single buffered']
    #allocation3 [shape = 's32[1]{0}', space=sflag, size = 0x4, scoped, tag = 'scoped memory for tpu_custom_call.1']
    #allocation4 [shape = 'u8[786432]{0}', space=vmem, size = 0xc0000, scoped, tag = 'input window, operand 2, single buffered']
    #allocation5 [shape = 's32[1]{0}', space=sflag, size = 0x4, scoped, tag = 'scoped memory for tpu_custom_call.1']
    #allocation6 [shape = 'u8[786432]{0}', space=vmem, size = 0xc0000, scoped, tag = 'input window, operand 4, single buffered']
    #allocation7 [shape = 'u8[2048]{0}', space=vmem, size = 0x800, scoped, tag = 'input window, operand 5, single buffered']
    #allocation8 [shape = 's32[1]{0}', space=sflag, size = 0x4, scoped, tag = 'scoped memory for tpu_custom_call.1']
    %11 = vsyncpa [#allocation3], 0
    %12 = vsyncpa [#allocation5], 0
    %13 = vsyncpa [#allocation8], 0
    // Predicated region
    $region2: #{tpu_custom_call.1} parent=1 // pred_check
      _
    $region3: #{tpu_custom_call.1} parent=1 // pred_check_branch
      %15 = sbr.rel (0) target = $region5
    $region4: #{tpu_custom_call.1} parent=1 // pred_region
      _
    $region5: #{tpu_custom_call.1} parent=1 // pred_fallthru
      _
    // Predicated region
    $region6: #{tpu_custom_call.1} parent=1 // pred_check
      _
    $region7: #{tpu_custom_call.1} parent=1 // pred_check_branch
      %17 = sbr.rel (0) target = $region9
    $region8: #{tpu_custom_call.1} parent=1 // pred_region
      %19 = vsyncadd [#allocation3], 0
      %s20 = sshll.u32 %s1, 4
      %s21 = int_to_ptr.hbm [resolvable:$true] %s20
      %s22 = sshll.u32 [#allocation2], 4
      %s23 = int_to_ptr.vmem [resolvable:$true] %s22
      %28 = dma.hbm_to_vmem [thread:$0]  %s21, 768, %s23, [#allocation3], 384, 384, 24
    $region9: #{tpu_custom_call.1} parent=1 // pred_fallthru
      _
    // Predicated region
    $region10: #{tpu_custom_call.1} parent=1 // pred_check
      _
    $region11: #{tpu_custom_call.1} parent=1 // pred_check_branch
      %30 = sbr.rel (0) target = $region13
    $region12: #{tpu_custom_call.1} parent=1 // pred_region
      %32 = vsyncadd [#allocation5], 0
      %s33 = sshll.u32 %s2, 4
      %s34 = int_to_ptr.hbm [resolvable:$true] %s33
      %s35 = sshll.u32 [#allocation4], 4
      %s36 = int_to_ptr.vmem [resolvable:$true] %s35
      %41 = dma.hbm_to_vmem [thread:$0]  %s34, 24576, %s36, [#allocation5], 256, 256, 16
    $region13: #{tpu_custom_call.1} parent=1 // pred_fallthru
      _
    // Predicated region
    $region14: #{tpu_custom_call.1} parent=1 // pred_check
      _
    $region15: #{tpu_custom_call.1} parent=1 // pred_check_branch
      %43 = sbr.rel (0) target = $region17
    $region16: #{tpu_custom_call.1} parent=1 // pred_region
      _
    $region17: #{tpu_custom_call.1} parent=1 // pred_fallthru
      _
    // Predicated region
    $region18: #{tpu_custom_call.1} parent=1 // pred_check
      _
    $region19: #{tpu_custom_call.1} parent=1 // pred_check_branch
      %45 = sbr.rel (0) target = $region21
    $region20: #{tpu_custom_call.1} parent=1 // pred_region
      %47 = vsyncadd [#allocation5], 0
      %s48 = sshll.u32 %s4, 4
      %s49 = int_to_ptr.hbm [resolvable:$true] %s48
      %s50 = sshll.u32 [#allocation6], 4
      %s51 = int_to_ptr.vmem [resolvable:$true] %s50
      %56 = dma.hbm_to_vmem [thread:$0]  %s49, 24576, %s51, [#allocation5], 384, 384, 24
    $region21: #{tpu_custom_call.1} parent=1 // pred_fallthru
      _
    // Predicated region
    $region22: #{tpu_custom_call.1} parent=1 // pred_check
      _
    $region23: #{tpu_custom_call.1} parent=1 // pred_check_branch
      %58 = sbr.rel (0) target = $region25
    $region24: #{tpu_custom_call.1} parent=1 // pred_region
      %60 = vsyncadd [#allocation8], 0
      %s62 = sshll.u32 %s5, 4
      %s63 = int_to_ptr.hbm [resolvable:$true] %s62
      %s64 = sshll.u32 [#allocation7], 4
      %s65 = int_to_ptr.vmem [resolvable:$true] %s64
      %67 = dma.hbm_to_vmem [thread:$0]  %s63, 64, %s65, [#allocation8]
    $region25: #{tpu_custom_call.1} parent=1 // pred_fallthru
      _
    // Predicated region
    $region26: #{tpu_custom_call.1} parent=1 // pred_check
      _
    $region27: #{tpu_custom_call.1} parent=1 // pred_check_branch
      %69 = sbr.rel (0) target = $region29
    $region28: #{tpu_custom_call.1} parent=1 // pred_region
      %71 = dma.done [#allocation3], 768
    $region29: #{tpu_custom_call.1} parent=1 // pred_fallthru
      _
    // Predicated region
    $region30: #{tpu_custom_call.1} parent=1 // pred_check
      _
    $region31: #{tpu_custom_call.1} parent=1 // pred_check_branch
      %73 = sbr.rel (0) target = $region33
    $region32: #{tpu_custom_call.1} parent=1 // pred_region
      %75 = dma.done [#allocation5], 24576
    $region33: #{tpu_custom_call.1} parent=1 // pred_fallthru
      _
    // Predicated region
    $region34: #{tpu_custom_call.1} parent=1 // pred_check
      _
    $region35: #{tpu_custom_call.1} parent=1 // pred_check_branch
      %77 = sbr.rel (0) target = $region37
    $region36: #{tpu_custom_call.1} parent=1 // pred_region
      %79 = dma.done [#allocation5], 24576
    $region37: #{tpu_custom_call.1} parent=1 // pred_fallthru
      _
    // Predicated region
    $region38: #{tpu_custom_call.1} parent=1 // pred_check
      _
    $region39: #{tpu_custom_call.1} parent=1 // pred_check_branch
      %81 = sbr.rel (0) target = $region41
    $region40: #{tpu_custom_call.1} parent=1 // pred_region
      %83 = dma.done [#allocation8], 64
    $region41: #{tpu_custom_call.1} parent=1 // pred_fallthru
      _
    %v85 = vld [vmem:[#allocation2] sm:$0xff]
    %v86 = vld [vmem:[#allocation2 + $0x8] sm:$0xff]
    %v87 = vld [vmem:[#allocation2 + $0x10] sm:$0xff]
    %v88 = vld [vmem:[#allocation2 + $0x18] sm:$0xff]
    %v89 = vld [vmem:[#allocation2 + $0x20] sm:$0xff]
    %v90 = vld [vmem:[#allocation2 + $0x28] sm:$0xff]
    %v91 = vld [vmem:[%s0] sm:$0x1]
    %v92 = vld [vmem:[%s0 + $0x1] sm:$0x1]
    %v93 = vcvt.s32.f32 %v91
    %v94 = vcvt.s32.f32 %v92
    %v95 = vlaneseq
    %v96 = vshrl.u32 %v95, 7
    %v97 = vperm.slane %v91, 0
    %v98 = vperm.slane %v92, 0
    %vm99 = vcmp.gt.s32.totalorder %v97, %v96
    %vm100 = vcmp.gt.s32.totalorder %v98, %v96
    %v101 = vsel %vm99, 1, 0
    %v102 = vsel %vm100, 1, 0
    %103 = vset.pattern.permute.xlu0 0
    %104 = vperm.xlu0 %103, %v101
    %v105 = vpop.permute.xlu0 %104
    %106 = vset.pattern.permute.xlu0 0
    %107 = vperm.xlu0 %106, %v102
    %v108 = vpop.permute.xlu0 %107
    %vm109 = vcmp.eq.s32.totalorder %v105, 1
    %vm110 = vcmp.eq.s32.totalorder %v108, 1
    %vm111 = vmpackc.low %vm109, %vm109
    %vm112 = vmpackc.low %vm110, %vm110
    %v113 = vsel %vm111, %v85, 0
    %v114 = vsel %vm111, %v86, 0
    %v115 = vsel %vm111, %v87, 0
    %v116 = vsel %vm112, %v88, 0
    %v117 = vsel %vm112, %v89, 0
    %v118 = vsel %vm112, %v90, 0
    %v119 = vunpack.c.l.bf16 %v113
    %v120 = vunpack.c.h.bf16 %v113
    %v121 = vunpack.c.l.bf16 %v114
    %v122 = vunpack.c.h.bf16 %v114
    %v123 = vunpack.c.l.bf16 %v115
    %v124 = vunpack.c.h.bf16 %v115
    %v125 = vunpack.c.l.bf16 %v116
    %v126 = vunpack.c.h.bf16 %v116
    %v127 = vunpack.c.l.bf16 %v117
    %v128 = vunpack.c.h.bf16 %v117
    %v129 = vunpack.c.l.bf16 %v118
    %v130 = vunpack.c.h.bf16 %v118
    %v131 = vrot.slane %v119, 4
    %v132 = vadd.f32 %v119, %v131
    %v133 = vrot.slane %v132, 2
    %v134 = vadd.f32 %v132, %v133
    %v135 = vrot.slane %v134, 1
    %v136 = vadd.f32 %v134, %v135
    %v137 = vrot.slane %v120, 4
    %v138 = vadd.f32 %v120, %v137
    %v139 = vrot.slane %v138, 2
    %v140 = vadd.f32 %v138, %v139
    %v141 = vrot.slane %v140, 1
    %v142 = vadd.f32 %v140, %v141
    %v143 = vrot.slane %v121, 4
    %v144 = vadd.f32 %v121, %v143
    %v145 = vrot.slane %v144, 2
    %v146 = vadd.f32 %v144, %v145
    %v147 = vrot.slane %v146, 1
    %v148 = vadd.f32 %v146, %v147
    %v149 = vrot.slane %v122, 4
    %v150 = vadd.f32 %v122, %v149
    %v151 = vrot.slane %v150, 2
    %v152 = vadd.f32 %v150, %v151
    %v153 = vrot.slane %v152, 1
    %v154 = vadd.f32 %v152, %v153
    %v155 = vrot.slane %v123, 4
    %v156 = vadd.f32 %v123, %v155
    %v157 = vrot.slane %v156, 2
    %v158 = vadd.f32 %v156, %v157
    %v159 = vrot.slane %v158, 1
    %v160 = vadd.f32 %v158, %v159
    %v161 = vrot.slane %v124, 4
    %v162 = vadd.f32 %v124, %v161
    %v163 = vrot.slane %v162, 2
    %v164 = vadd.f32 %v162, %v163
    %v165 = vrot.slane %v164, 1
    %v166 = vadd.f32 %v164, %v165
    %v167 = vrot.slane %v125, 4
    %v168 = vadd.f32 %v125, %v167
    %v169 = vrot.slane %v168, 2
    %v170 = vadd.f32 %v168, %v169
    %v171 = vrot.slane %v170, 1
    %v172 = vadd.f32 %v170, %v171
    %v173 = vrot.slane %v126, 4
    %v174 = vadd.f32 %v126, %v173
    %v175 = vrot.slane %v174, 2
    %v176 = vadd.f32 %v174, %v175
    %v177 = vrot.slane %v176, 1
    %v178 = vadd.f32 %v176, %v177
    %v179 = vrot.slane %v127, 4
    %v180 = vadd.f32 %v127, %v179
    %v181 = vrot.slane %v180, 2
    %v182 = vadd.f32 %v180, %v181
    %v183 = vrot.slane %v182, 1
    %v184 = vadd.f32 %v182, %v183
    %v185 = vrot.slane %v128, 4
    %v186 = vadd.f32 %v128, %v185
    %v187 = vrot.slane %v186, 2
    %v188 = vadd.f32 %v186, %v187
    %v189 = vrot.slane %v188, 1
    %v190 = vadd.f32 %v188, %v189
    %v191 = vrot.slane %v129, 4
    %v192 = vadd.f32 %v129, %v191
    %v193 = vrot.slane %v192, 2
    %v194 = vadd.f32 %v192, %v193
    %v195 = vrot.slane %v194, 1
    %v196 = vadd.f32 %v194, %v195
    %v197 = vrot.slane %v130, 4
    %v198 = vadd.f32 %v130, %v197
    %v199 = vrot.slane %v198, 2
    %v200 = vadd.f32 %v198, %v199
    %v201 = vrot.slane %v200, 1
    %v202 = vadd.f32 %v200, %v201
    %204 = vset.pattern.permute.xlu0 0
    %205 = vperm.xlu0 %204, %v93
    %v206 = vpop.permute.xlu0 %205
    %v208 = vperm.slane %v206, 0
    %210 = vset.pattern.permute.xlu0 0
    %211 = vperm.xlu0 %210, %v94
    %v212 = vpop.permute.xlu0 %211
    %v214 = vperm.slane %v212, 0
    %v215 = vrcp.pop %v208
    %v216 = vmul.f32 %v208, %v215
    %v217 = vsub.f32 1.0, %v216
    %v218 = vmul.f32 %v215, %v217
    %v219 = vadd.f32 %v215, %v218
    %vm220 = vweird.f32 %v208
    %vm221 = vweird.f32 %v215
    %vm222 = vmor %vm220, %vm221
    %v223 = vsel %vm222, %v215, %v219
    %v224 = vand.u32 2147483647, %v208
    %vm225 = vcmp.eq.f32.partialorder %v224, 8.507059e+37
    %v226 = vand.u32 %v208, 2147483648
    %v227 = vor.u32 1.1754944e-38, %v226
    %v228 = vsel %vm225, %v227, %v223
    %v229 = vmul.f32 %v136, %v228
    %v230 = vmul.f32 %v142, %v228
    %v231 = vmul.f32 %v148, %v228
    %v232 = vmul.f32 %v154, %v228
    %v233 = vmul.f32 %v160, %v228
    %v234 = vmul.f32 %v166, %v228
    %v235 = vrcp.pop %v214
    %v236 = vmul.f32 %v214, %v235
    %v237 = vsub.f32 1.0, %v236
    %v238 = vmul.f32 %v235, %v237
    %v239 = vadd.f32 %v235, %v238
    %vm240 = vweird.f32 %v214
    %vm241 = vweird.f32 %v235
    %vm242 = vmor %vm240, %vm241
    %v243 = vsel %vm242, %v235, %v239
    %v244 = vand.u32 2147483647, %v214
    %vm245 = vcmp.eq.f32.partialorder %v244, 8.507059e+37
    %v246 = vand.u32 %v214, 2147483648
    %v247 = vor.u32 1.1754944e-38, %v246
    %v248 = vsel %vm245, %v247, %v243
    %v249 = vmul.f32 %v172, %v248
    %v250 = vmul.f32 %v178, %v248
    %v251 = vmul.f32 %v184, %v248
    %v252 = vmul.f32 %v190, %v248
    %v253 = vmul.f32 %v196, %v248
    %v254 = vmul.f32 %v202, %v248
    %v255 = vpack.c.bf16 %v229, %v229
    %v256 = vpack.c.bf16 %v230, %v230
    %v257 = vpack.c.bf16 %v231, %v231
    %v258 = vpack.c.bf16 %v232, %v232
    %v259 = vpack.c.bf16 %v233, %v233
    %v260 = vpack.c.bf16 %v234, %v234
    %v261 = vpack.c.bf16 %v249, %v249
    %v262 = vpack.c.bf16 %v250, %v250
    %v263 = vpack.c.bf16 %v251, %v251
    %v264 = vpack.c.bf16 %v252, %v252
    %v265 = vpack.c.bf16 %v253, %v253
    %v266 = vpack.c.bf16 %v254, %v254
    %v267 = vld [vmem:[#allocation4] sm:$0xff]
    %v268 = vld [vmem:[#allocation4 + $0x8] sm:$0xff]
    %v269 = vld [vmem:[#allocation4 + $0x10] sm:$0xff]
    %v270 = vld [vmem:[#allocation4 + $0x18] sm:$0xff]
    %v271 = vld [vmem:[#allocation4 + $0x20] sm:$0xff]
    %v272 = vld [vmem:[#allocation4 + $0x28] sm:$0xff]
    %v273 = vld [vmem:[#allocation4 + $0x30] sm:$0xff]
    %v274 = vld [vmem:[#allocation4 + $0x38] sm:$0xff]
    %v275 = vld [vmem:[#allocation4 + $0x40] sm:$0xff]
    %v276 = vld [vmem:[#allocation4 + $0x48] sm:$0xff]
    %v277 = vld [vmem:[#allocation4 + $0x50] sm:$0xff]
    %v278 = vld [vmem:[#allocation4 + $0x58] sm:$0xff]
    %v279 = vld [vmem:[#allocation4 + $0x60] sm:$0xff]
    %v280 = vld [vmem:[#allocation4 + $0x68] sm:$0xff]
    %v281 = vld [vmem:[#allocation4 + $0x70] sm:$0xff]
    %v282 = vld [vmem:[#allocation4 + $0x78] sm:$0xff]
    %v283 = vld [vmem:[#allocation4 + $0x80] sm:$0xff]
    %v284 = vld [vmem:[#allocation4 + $0x88] sm:$0xff]
    %v285 = vld [vmem:[#allocation4 + $0x90] sm:$0xff]
    %v286 = vld [vmem:[#allocation4 + $0x98] sm:$0xff]
    %v287 = vld [vmem:[#allocation4 + $0xa0] sm:$0xff]
    %v288 = vld [vmem:[#allocation4 + $0xa8] sm:$0xff]
    %v289 = vld [vmem:[#allocation4 + $0xb0] sm:$0xff]
    %v290 = vld [vmem:[#allocation4 + $0xb8] sm:$0xff]
    %v291 = vld [vmem:[#allocation4 + $0xc0] sm:$0xff]
    %v292 = vld [vmem:[#allocation4 + $0xc8] sm:$0xff]
    %v293 = vld [vmem:[#allocation4 + $0xd0] sm:$0xff]
    %v294 = vld [vmem:[#allocation4 + $0xd8] sm:$0xff]
    %v295 = vld [vmem:[#allocation4 + $0xe0] sm:$0xff]
    %v296 = vld [vmem:[#allocation4 + $0xe8] sm:$0xff]
    %v297 = vld [vmem:[#allocation4 + $0xf0] sm:$0xff]
    %v298 = vld [vmem:[#allocation4 + $0xf8] sm:$0xff]
    %v299 = vld [vmem:[#allocation4 + $0x100] sm:$0xff]
    %v300 = vld [vmem:[#allocation4 + $0x108] sm:$0xff]
    %v301 = vld [vmem:[#allocation4 + $0x110] sm:$0xff]
    %v302 = vld [vmem:[#allocation4 + $0x118] sm:$0xff]
    %v303 = vld [vmem:[#allocation4 + $0x120] sm:$0xff]
    %v304 = vld [vmem:[#allocation4 + $0x128] sm:$0xff]
    %v305 = vld [vmem:[#allocation4 + $0x130] sm:$0xff]
    %v306 = vld [vmem:[#allocation4 + $0x138] sm:$0xff]
    %v307 = vld [vmem:[#allocation4 + $0x140] sm:$0xff]
    %v308 = vld [vmem:[#allocation4 + $0x148] sm:$0xff]
    %v309 = vld [vmem:[#allocation4 + $0x150] sm:$0xff]
    %v310 = vld [vmem:[#allocation4 + $0x158] sm:$0xff]
    %v311 = vld [vmem:[#allocation4 + $0x160] sm:$0xff]
    %v312 = vld [vmem:[#allocation4 + $0x168] sm:$0xff]
    %v313 = vld [vmem:[#allocation4 + $0x170] sm:$0xff]
    %v314 = vld [vmem:[#allocation4 + $0x178] sm:$0xff]
    %v315 = vld [vmem:[#allocation4 + $0x180] sm:$0xff]
    %v316 = vld [vmem:[#allocation4 + $0x188] sm:$0xff]
    %v317 = vld [vmem:[#allocation4 + $0x190] sm:$0xff]
    %v318 = vld [vmem:[#allocation4 + $0x198] sm:$0xff]
    %v319 = vld [vmem:[#allocation4 + $0x1a0] sm:$0xff]
    %v320 = vld [vmem:[#allocation4 + $0x1a8] sm:$0xff]
    %v321 = vld [vmem:[#allocation4 + $0x1b0] sm:$0xff]
    %v322 = vld [vmem:[#allocation4 + $0x1b8] sm:$0xff]
    %v323 = vld [vmem:[#allocation4 + $0x1c0] sm:$0xff]
    %v324 = vld [vmem:[#allocation4 + $0x1c8] sm:$0xff]
    %v325 = vld [vmem:[#allocation4 + $0x1d0] sm:$0xff]
    %v326 = vld [vmem:[#allocation4 + $0x1d8] sm:$0xff]
    %v327 = vld [vmem:[#allocation4 + $0x1e0] sm:$0xff]
    %v328 = vld [vmem:[#allocation4 + $0x1e8] sm:$0xff]
    %v329 = vld [vmem:[#allocation4 + $0x1f0] sm:$0xff]
    %v330 = vld [vmem:[#allocation4 + $0x1f8] sm:$0xff]
    %v331 = vld [vmem:[#allocation4 + $0x200] sm:$0xff]
    %v332 = vld [vmem:[#allocation4 + $0x208] sm:$0xff]
    %v333 = vld [vmem:[#allocation4 + $0x210] sm:$0xff]
    %v334 = vld [vmem:[#allocation4 + $0x218] sm:$0xff]
    %v335 = vld [vmem:[#allocation4 + $0x220] sm:$0xff]
    %v336 = vld [vmem:[#allocation4 + $0x228] sm:$0xff]
    %v337 = vld [vmem:[#allocation4 + $0x230] sm:$0xff]
    %v338 = vld [vmem:[#allocation4 + $0x238] sm:$0xff]
    %v339 = vld [vmem:[#allocation4 + $0x240] sm:$0xff]
    %v340 = vld [vmem:[#allocation4 + $0x248] sm:$0xff]
    %v341 = vld [vmem:[#allocation4 + $0x250] sm:$0xff]
    %v342 = vld [vmem:[#allocation4 + $0x258] sm:$0xff]
    %v343 = vld [vmem:[#allocation4 + $0x260] sm:$0xff]
    %v344 = vld [vmem:[#allocation4 + $0x268] sm:$0xff]
    %v345 = vld [vmem:[#allocation4 + $0x270] sm:$0xff]
    %v346 = vld [vmem:[#allocation4 + $0x278] sm:$0xff]
    %v347 = vld [vmem:[#allocation4 + $0x280] sm:$0xff]
    %v348 = vld [vmem:[#allocation4 + $0x288] sm:$0xff]
    %v349 = vld [vmem:[#allocation4 + $0x290] sm:$0xff]
    %v350 = vld [vmem:[#allocation4 + $0x298] sm:$0xff]
    %v351 = vld [vmem:[#allocation4 + $0x2a0] sm:$0xff]
    %v352 = vld [vmem:[#allocation4 + $0x2a8] sm:$0xff]
    %v353 = vld [vmem:[#allocation4 + $0x2b0] sm:$0xff]
    %v354 = vld [vmem:[#allocation4 + $0x2b8] sm:$0xff]
    %v355 = vld [vmem:[#allocation4 + $0x2c0] sm:$0xff]
    %v356 = vld [vmem:[#allocation4 + $0x2c8] sm:$0xff]
    %v357 = vld [vmem:[#allocation4 + $0x2d0] sm:$0xff]
    %v358 = vld [vmem:[#allocation4 + $0x2d8] sm:$0xff]
    %v359 = vld [vmem:[#allocation4 + $0x2e0] sm:$0xff]
    %v360 = vld [vmem:[#allocation4 + $0x2e8] sm:$0xff]
    %v361 = vld [vmem:[#allocation4 + $0x2f0] sm:$0xff]
    %v362 = vld [vmem:[#allocation4 + $0x2f8] sm:$0xff]
    %v363 = vld [vmem:[#allocation4 + $0x300] sm:$0xff]
    %v364 = vld [vmem:[#allocation4 + $0x308] sm:$0xff]
    %v365 = vld [vmem:[#allocation4 + $0x310] sm:$0xff]
    %v366 = vld [vmem:[#allocation4 + $0x318] sm:$0xff]
    %v367 = vld [vmem:[#allocation4 + $0x320] sm:$0xff]
    %v368 = vld [vmem:[#allocation4 + $0x328] sm:$0xff]
    %v369 = vld [vmem:[#allocation4 + $0x330] sm:$0xff]
    %v370 = vld [vmem:[#allocation4 + $0x338] sm:$0xff]
    %v371 = vld [vmem:[#allocation4 + $0x340] sm:$0xff]
    %v372 = vld [vmem:[#allocation4 + $0x348] sm:$0xff]
    %v373 = vld [vmem:[#allocation4 + $0x350] sm:$0xff]
    %v374 = vld [vmem:[#allocation4 + $0x358] sm:$0xff]
    %v375 = vld [vmem:[#allocation4 + $0x360] sm:$0xff]
    %v376 = vld [vmem:[#allocation4 + $0x368] sm:$0xff]
    %v377 = vld [vmem:[#allocation4 + $0x370] sm:$0xff]
    %v378 = vld [vmem:[#allocation4 + $0x378] sm:$0xff]
    %v379 = vld [vmem:[#allocation4 + $0x380] sm:$0xff]
    %v380 = vld [vmem:[#allocation4 + $0x388] sm:$0xff]
    %v381 = vld [vmem:[#allocation4 + $0x390] sm:$0xff]
    %v382 = vld [vmem:[#allocation4 + $0x398] sm:$0xff]
    %v383 = vld [vmem:[#allocation4 + $0x3a0] sm:$0xff]
    %v384 = vld [vmem:[#allocation4 + $0x3a8] sm:$0xff]
    %v385 = vld [vmem:[#allocation4 + $0x3b0] sm:$0xff]
    %v386 = vld [vmem:[#allocation4 + $0x3b8] sm:$0xff]
    %v387 = vld [vmem:[#allocation4 + $0x3c0] sm:$0xff]
    %v388 = vld [vmem:[#allocation4 + $0x3c8] sm:$0xff]
    %v389 = vld [vmem:[#allocation4 + $0x3d0] sm:$0xff]
    %v390 = vld [vmem:[#allocation4 + $0x3d8] sm:$0xff]
    %v391 = vld [vmem:[#allocation4 + $0x3e0] sm:$0xff]
    %v392 = vld [vmem:[#allocation4 + $0x3e8] sm:$0xff]
    %v393 = vld [vmem:[#allocation4 + $0x3f0] sm:$0xff]
    %v394 = vld [vmem:[#allocation4 + $0x3f8] sm:$0xff]
    %v395 = vld [vmem:[#allocation4 + $0x400] sm:$0xff]
    %v396 = vld [vmem:[#allocation4 + $0x408] sm:$0xff]
    %v397 = vld [vmem:[#allocation4 + $0x410] sm:$0xff]
    %v398 = vld [vmem:[#allocation4 + $0x418] sm:$0xff]
    %v399 = vld [vmem:[#allocation4 + $0x420] sm:$0xff]
    %v400 = vld [vmem:[#allocation4 + $0x428] sm:$0xff]
    %v401 = vld [vmem:[#allocation4 + $0x430] sm:$0xff]
    %v402 = vld [vmem:[#allocation4 + $0x438] sm:$0xff]
    %v403 = vld [vmem:[#allocation4 + $0x440] sm:$0xff]
    %v404 = vld [vmem:[#allocation4 + $0x448] sm:$0xff]
    %v405 = vld [vmem:[#allocation4 + $0x450] sm:$0xff]
    %v406 = vld [vmem:[#allocation4 + $0x458] sm:$0xff]
    %v407 = vld [vmem:[#allocation4 + $0x460] sm:$0xff]
    %v408 = vld [vmem:[#allocation4 + $0x468] sm:$0xff]
    %v409 = vld [vmem:[#allocation4 + $0x470] sm:$0xff]
    %v410 = vld [vmem:[#allocation4 + $0x478] sm:$0xff]
    %v411 = vld [vmem:[#allocation4 + $0x480] sm:$0xff]
    %v412 = vld [vmem:[#allocation4 + $0x488] sm:$0xff]
    %v413 = vld [vmem:[#allocation4 + $0x490] sm:$0xff]
    %v414 = vld [vmem:[#allocation4 + $0x498] sm:$0xff]
    %v415 = vld [vmem:[#allocation4 + $0x4a0] sm:$0xff]
    %v416 = vld [vmem:[#allocation4 + $0x4a8] sm:$0xff]
    %v417 = vld [vmem:[#allocation4 + $0x4b0] sm:$0xff]
    %v418 = vld [vmem:[#allocation4 + $0x4b8] sm:$0xff]
    %v419 = vld [vmem:[#allocation4 + $0x4c0] sm:$0xff]
    %v420 = vld [vmem:[#allocation4 + $0x4c8] sm:$0xff]
    %v421 = vld [vmem:[#allocation4 + $0x4d0] sm:$0xff]
    %v422 = vld [vmem:[#allocation4 + $0x4d8] sm:$0xff]
    %v423 = vld [vmem:[#allocation4 + $0x4e0] sm:$0xff]
    %v424 = vld [vmem:[#allocation4 + $0x4e8] sm:$0xff]
    %v425 = vld [vmem:[#allocation4 + $0x4f0] sm:$0xff]
    %v426 = vld [vmem:[#allocation4 + $0x4f8] sm:$0xff]
    %v427 = vld [vmem:[#allocation4 + $0x500] sm:$0xff]
    %v428 = vld [vmem:[#allocation4 + $0x508] sm:$0xff]
    %v429 = vld [vmem:[#allocation4 + $0x510] sm:$0xff]
    %v430 = vld [vmem:[#allocation4 + $0x518] sm:$0xff]
    %v431 = vld [vmem:[#allocation4 + $0x520] sm:$0xff]
    %v432 = vld [vmem:[#allocation4 + $0x528] sm:$0xff]
    %v433 = vld [vmem:[#allocation4 + $0x530] sm:$0xff]
    %v434 = vld [vmem:[#allocation4 + $0x538] sm:$0xff]
    %v435 = vld [vmem:[#allocation4 + $0x540] sm:$0xff]
    %v436 = vld [vmem:[#allocation4 + $0x548] sm:$0xff]
    %v437 = vld [vmem:[#allocation4 + $0x550] sm:$0xff]
    %v438 = vld [vmem:[#allocation4 + $0x558] sm:$0xff]
    %v439 = vld [vmem:[#allocation4 + $0x560] sm:$0xff]
    %v440 = vld [vmem:[#allocation4 + $0x568] sm:$0xff]
    %v441 = vld [vmem:[#allocation4 + $0x570] sm:$0xff]
    %v442 = vld [vmem:[#allocation4 + $0x578] sm:$0xff]
    %v443 = vld [vmem:[#allocation4 + $0x580] sm:$0xff]
    %v444 = vld [vmem:[#allocation4 + $0x588] sm:$0xff]
    %v445 = vld [vmem:[#allocation4 + $0x590] sm:$0xff]
    %v446 = vld [vmem:[#allocation4 + $0x598] sm:$0xff]
    %v447 = vld [vmem:[#allocation4 + $0x5a0] sm:$0xff]
    %v448 = vld [vmem:[#allocation4 + $0x5a8] sm:$0xff]
    %v449 = vld [vmem:[#allocation4 + $0x5b0] sm:$0xff]
    %v450 = vld [vmem:[#allocation4 + $0x5b8] sm:$0xff]
    %v451 = vld [vmem:[#allocation4 + $0x5c0] sm:$0xff]
    %v452 = vld [vmem:[#allocation4 + $0x5c8] sm:$0xff]
    %v453 = vld [vmem:[#allocation4 + $0x5d0] sm:$0xff]
    %v454 = vld [vmem:[#allocation4 + $0x5d8] sm:$0xff]
    %v455 = vld [vmem:[#allocation4 + $0x5e0] sm:$0xff]
    %v456 = vld [vmem:[#allocation4 + $0x5e8] sm:$0xff]
    %v457 = vld [vmem:[#allocation4 + $0x5f0] sm:$0xff]
    %v458 = vld [vmem:[#allocation4 + $0x5f8] sm:$0xff]
    %v459 = vld [vmem:[%s3] sm:$0xf]
    %v461 = vperm.slane %v459, 0
    %v462 = vperm.slane %v459, 1
    %v463 = vperm.slane %v459, 2
    %v464 = vperm.slane %v459, 3
    %v481 = vunpack.c.l.b16 %v255
    %v482 = vunpack.c.l.b16 %v256
    %v483 = vunpack.c.l.b16 %v257
    %v484 = vunpack.c.l.b16 %v258
    %v485 = vunpack.c.l.b16 %v259
    %v486 = vunpack.c.l.b16 %v260
    %v487 = vunpack.c.l.b16 %v261
    %v488 = vunpack.c.l.b16 %v262
    %v489 = vunpack.c.l.b16 %v263
    %v490 = vunpack.c.l.b16 %v264
    %v491 = vunpack.c.l.b16 %v265
    %v492 = vunpack.c.l.b16 %v266
    %v493 = vrot.slane %v487, 7
    %vm494 = vcmask 1041409
    %v495 = vsel %vm494, %v493, %v481
    %v496 = vrot.slane %v488, 7
    %v497 = vsel %vm494, %v496, %v482
    %v498 = vrot.slane %v489, 7
    %v499 = vsel %vm494, %v498, %v483
    %v500 = vrot.slane %v490, 7
    %v501 = vsel %vm494, %v500, %v484
    %v502 = vrot.slane %v491, 7
    %v503 = vsel %vm494, %v502, %v485
    %v504 = vrot.slane %v492, 7
    %v505 = vsel %vm494, %v504, %v486
    %v506 = vpack.c.b16 %v495, %v495
    %v507 = vpack.c.b16 %v497, %v497
    %v508 = vpack.c.b16 %v499, %v499
    %v509 = vpack.c.b16 %v501, %v501
    %v510 = vpack.c.b16 %v503, %v503
    %v511 = vpack.c.b16 %v505, %v505
    %v710 = vunpack.c.l.b16 %v267
    %v711 = vunpack.c.h.b16 %v267
    %v712 = vunpack.c.l.b16 %v268
    %v713 = vunpack.c.h.b16 %v268
    %v714 = vunpack.c.l.b16 %v269
    %v715 = vunpack.c.h.b16 %v269
    %v716 = vunpack.c.l.b16 %v270
    %v717 = vunpack.c.h.b16 %v270
    %v718 = vunpack.c.l.b16 %v271
    %v719 = vunpack.c.h.b16 %v271
    %v720 = vunpack.c.l.b16 %v272
    %v721 = vunpack.c.h.b16 %v272
    %v722 = vunpack.c.l.b16 %v273
    %v723 = vunpack.c.h.b16 %v273
    %v724 = vunpack.c.l.b16 %v274
    %v725 = vunpack.c.h.b16 %v274
    %v726 = vunpack.c.l.b16 %v275
    %v727 = vunpack.c.h.b16 %v275
    %v728 = vunpack.c.l.b16 %v276
    %v729 = vunpack.c.h.b16 %v276
    %v730 = vunpack.c.l.b16 %v277
    %v731 = vunpack.c.h.b16 %v277
    %v732 = vunpack.c.l.b16 %v278
    %v733 = vunpack.c.h.b16 %v278
    %v734 = vunpack.c.l.b16 %v279
    %v735 = vunpack.c.h.b16 %v279
    %v736 = vunpack.c.l.b16 %v280
    %v737 = vunpack.c.h.b16 %v280
    %v738 = vunpack.c.l.b16 %v281
    %v739 = vunpack.c.h.b16 %v281
    %v740 = vunpack.c.l.b16 %v282
    %v741 = vunpack.c.h.b16 %v282
    %v742 = vunpack.c.l.b16 %v283
    %v743 = vunpack.c.h.b16 %v283
    %v744 = vunpack.c.l.b16 %v284
    %v745 = vunpack.c.h.b16 %v284
    %v746 = vunpack.c.l.b16 %v285
    %v747 = vunpack.c.h.b16 %v285
    %v748 = vunpack.c.l.b16 %v286
    %v749 = vunpack.c.h.b16 %v286
    %v750 = vunpack.c.l.b16 %v287
    %v751 = vunpack.c.h.b16 %v287
    %v752 = vunpack.c.l.b16 %v288
    %v753 = vunpack.c.h.b16 %v288
    %v754 = vunpack.c.l.b16 %v289
    %v755 = vunpack.c.h.b16 %v289
    %v756 = vunpack.c.l.b16 %v290
    %v757 = vunpack.c.h.b16 %v290
    %v758 = vunpack.c.l.b16 %v291
    %v759 = vunpack.c.h.b16 %v291
    %v760 = vunpack.c.l.b16 %v292
    %v761 = vunpack.c.h.b16 %v292
    %v762 = vunpack.c.l.b16 %v293
    %v763 = vunpack.c.h.b16 %v293
    %v764 = vunpack.c.l.b16 %v294
    %v765 = vunpack.c.h.b16 %v294
    %v766 = vunpack.c.l.b16 %v295
    %v767 = vunpack.c.h.b16 %v295
    %v768 = vunpack.c.l.b16 %v296
    %v769 = vunpack.c.h.b16 %v296
    %v770 = vunpack.c.l.b16 %v297
    %v771 = vunpack.c.h.b16 %v297
    %v772 = vunpack.c.l.b16 %v298
    %v773 = vunpack.c.h.b16 %v298
    %v774 = vunpack.c.l.b16 %v299
    %v775 = vunpack.c.h.b16 %v299
    %v776 = vunpack.c.l.b16 %v300
    %v777 = vunpack.c.h.b16 %v300
    %v778 = vunpack.c.l.b16 %v301
    %v779 = vunpack.c.h.b16 %v301
    %v780 = vunpack.c.l.b16 %v302
    %v781 = vunpack.c.h.b16 %v302
    %v782 = vunpack.c.l.b16 %v303
    %v783 = vunpack.c.h.b16 %v303
    %v784 = vunpack.c.l.b16 %v304
    %v785 = vunpack.c.h.b16 %v304
    %v786 = vunpack.c.l.b16 %v305
    %v787 = vunpack.c.h.b16 %v305
    %v788 = vunpack.c.l.b16 %v306
    %v789 = vunpack.c.h.b16 %v306
    %v790 = vunpack.c.l.b16 %v307
    %v791 = vunpack.c.h.b16 %v307
    %v792 = vunpack.c.l.b16 %v308
    %v793 = vunpack.c.h.b16 %v308
    %v794 = vunpack.c.l.b16 %v309
    %v795 = vunpack.c.h.b16 %v309
    %v796 = vunpack.c.l.b16 %v310
    %v797 = vunpack.c.h.b16 %v310
    %v798 = vunpack.c.l.b16 %v311
    %v799 = vunpack.c.h.b16 %v311
    %v800 = vunpack.c.l.b16 %v312
    %v801 = vunpack.c.h.b16 %v312
    %v802 = vunpack.c.l.b16 %v313
    %v803 = vunpack.c.h.b16 %v313
    %v804 = vunpack.c.l.b16 %v314
    %v805 = vunpack.c.h.b16 %v314
    %v806 = vunpack.c.l.b16 %v315
    %v807 = vunpack.c.h.b16 %v315
    %v808 = vunpack.c.l.b16 %v316
    %v809 = vunpack.c.h.b16 %v316
    %v810 = vunpack.c.l.b16 %v317
    %v811 = vunpack.c.h.b16 %v317
    %v812 = vunpack.c.l.b16 %v318
    %v813 = vunpack.c.h.b16 %v318
    %v814 = vunpack.c.l.b16 %v319
    %v815 = vunpack.c.h.b16 %v319
    %v816 = vunpack.c.l.b16 %v320
    %v817 = vunpack.c.h.b16 %v320
    %v818 = vunpack.c.l.b16 %v321
    %v819 = vunpack.c.h.b16 %v321
    %v820 = vunpack.c.l.b16 %v322
    %v821 = vunpack.c.h.b16 %v322
    %v822 = vunpack.c.l.b16 %v323
    %v823 = vunpack.c.h.b16 %v323
    %v824 = vunpack.c.l.b16 %v324
    %v825 = vunpack.c.h.b16 %v324
    %v826 = vunpack.c.l.b16 %v325
    %v827 = vunpack.c.h.b16 %v325
    %v828 = vunpack.c.l.b16 %v326
    %v829 = vunpack.c.h.b16 %v326
    %v830 = vunpack.c.l.b16 %v327
    %v831 = vunpack.c.h.b16 %v327
    %v832 = vunpack.c.l.b16 %v328
    %v833 = vunpack.c.h.b16 %v328
    %v834 = vunpack.c.l.b16 %v329
    %v835 = vunpack.c.h.b16 %v329
    %v836 = vunpack.c.l.b16 %v330
    %v837 = vunpack.c.h.b16 %v330
    %v838 = vunpack.c.l.b16 %v331
    %v839 = vunpack.c.h.b16 %v331
    %v840 = vunpack.c.l.b16 %v332
    %v841 = vunpack.c.h.b16 %v332
    %v842 = vunpack.c.l.b16 %v333
    %v843 = vunpack.c.h.b16 %v333
    %v844 = vunpack.c.l.b16 %v334
    %v845 = vunpack.c.h.b16 %v334
    %v846 = vunpack.c.l.b16 %v335
    %v847 = vunpack.c.h.b16 %v335
    %v848 = vunpack.c.l.b16 %v336
    %v849 = vunpack.c.h.b16 %v336
    %v850 = vunpack.c.l.b16 %v337
    %v851 = vunpack.c.h.b16 %v337
    %v852 = vunpack.c.l.b16 %v338
    %v853 = vunpack.c.h.b16 %v338
    %v854 = vunpack.c.l.b16 %v339
    %v855 = vunpack.c.h.b16 %v339
    %v856 = vunpack.c.l.b16 %v340
    %v857 = vunpack.c.h.b16 %v340
    %v858 = vunpack.c.l.b16 %v341
    %v859 = vunpack.c.h.b16 %v341
    %v860 = vunpack.c.l.b16 %v342
    %v861 = vunpack.c.h.b16 %v342
    %v862 = vunpack.c.l.b16 %v343
    %v863 = vunpack.c.h.b16 %v343
    %v864 = vunpack.c.l.b16 %v344
    %v865 = vunpack.c.h.b16 %v344
    %v866 = vunpack.c.l.b16 %v345
    %v867 = vunpack.c.h.b16 %v345
    %v868 = vunpack.c.l.b16 %v346
    %v869 = vunpack.c.h.b16 %v346
    %v870 = vunpack.c.l.b16 %v347
    %v871 = vunpack.c.h.b16 %v347
    %v872 = vunpack.c.l.b16 %v348
    %v873 = vunpack.c.h.b16 %v348
    %v874 = vunpack.c.l.b16 %v349
    %v875 = vunpack.c.h.b16 %v349
    %v876 = vunpack.c.l.b16 %v350
    %v877 = vunpack.c.h.b16 %v350
    %v878 = vunpack.c.l.b16 %v351
    %v879 = vunpack.c.h.b16 %v351
    %v880 = vunpack.c.l.b16 %v352
    %v881 = vunpack.c.h.b16 %v352
    %v882 = vunpack.c.l.b16 %v353
    %v883 = vunpack.c.h.b16 %v353
    %v884 = vunpack.c.l.b16 %v354
    %v885 = vunpack.c.h.b16 %v354
    %v886 = vunpack.c.l.b16 %v355
    %v887 = vunpack.c.h.b16 %v355
    %v888 = vunpack.c.l.b16 %v356
    %v889 = vunpack.c.h.b16 %v356
    %v890 = vunpack.c.l.b16 %v357
    %v891 = vunpack.c.h.b16 %v357
    %v892 = vunpack.c.l.b16 %v358
    %v893 = vunpack.c.h.b16 %v358
    %v894 = vunpack.c.l.b16 %v359
    %v895 = vunpack.c.h.b16 %v359
    %v896 = vunpack.c.l.b16 %v360
    %v897 = vunpack.c.h.b16 %v360
    %v898 = vunpack.c.l.b16 %v361
    %v899 = vunpack.c.h.b16 %v361
    %v900 = vunpack.c.l.b16 %v362
    %v901 = vunpack.c.h.b16 %v362
    %v902 = vunpack.c.l.b16 %v363
    %v903 = vunpack.c.h.b16 %v363
    %v904 = vunpack.c.l.b16 %v364
    %v905 = vunpack.c.h.b16 %v364
    %v906 = vunpack.c.l.b16 %v365
    %v907 = vunpack.c.h.b16 %v365
    %v908 = vunpack.c.l.b16 %v366
    %v909 = vunpack.c.h.b16 %v366
    %v910 = vunpack.c.l.b16 %v367
    %v911 = vunpack.c.h.b16 %v367
    %v912 = vunpack.c.l.b16 %v368
    %v913 = vunpack.c.h.b16 %v368
    %v914 = vunpack.c.l.b16 %v369
    %v915 = vunpack.c.h.b16 %v369
    %v916 = vunpack.c.l.b16 %v370
    %v917 = vunpack.c.h.b16 %v370
    %v918 = vunpack.c.l.b16 %v371
    %v919 = vunpack.c.h.b16 %v371
    %v920 = vunpack.c.l.b16 %v372
    %v921 = vunpack.c.h.b16 %v372
    %v922 = vunpack.c.l.b16 %v373
    %v923 = vunpack.c.h.b16 %v373
    %v924 = vunpack.c.l.b16 %v374
    %v925 = vunpack.c.h.b16 %v374
    %v926 = vunpack.c.l.b16 %v375
    %v927 = vunpack.c.h.b16 %v375
    %v928 = vunpack.c.l.b16 %v376
    %v929 = vunpack.c.h.b16 %v376
    %v930 = vunpack.c.l.b16 %v377
    %v931 = vunpack.c.h.b16 %v377
    %v932 = vunpack.c.l.b16 %v378
    %v933 = vunpack.c.h.b16 %v378
    %v934 = vunpack.c.l.b16 %v379
    %v935 = vunpack.c.h.b16 %v379
    %v936 = vunpack.c.l.b16 %v380
    %v937 = vunpack.c.h.b16 %v380
    %v938 = vunpack.c.l.b16 %v381
    %v939 = vunpack.c.h.b16 %v381
    %v940 = vunpack.c.l.b16 %v382
    %v941 = vunpack.c.h.b16 %v382
    %v942 = vunpack.c.l.b16 %v383
    %v943 = vunpack.c.h.b16 %v383
    %v944 = vunpack.c.l.b16 %v384
    %v945 = vunpack.c.h.b16 %v384
    %v946 = vunpack.c.l.b16 %v385
    %v947 = vunpack.c.h.b16 %v385
    %v948 = vunpack.c.l.b16 %v386
    %v949 = vunpack.c.h.b16 %v386
    %v950 = vunpack.c.l.b16 %v387
    %v951 = vunpack.c.h.b16 %v387
    %v952 = vunpack.c.l.b16 %v388
    %v953 = vunpack.c.h.b16 %v388
    %v954 = vunpack.c.l.b16 %v389
    %v955 = vunpack.c.h.b16 %v389
    %v956 = vunpack.c.l.b16 %v390
    %v957 = vunpack.c.h.b16 %v390
    %v958 = vunpack.c.l.b16 %v391
    %v959 = vunpack.c.h.b16 %v391
    %v960 = vunpack.c.l.b16 %v392
    %v961 = vunpack.c.h.b16 %v392
    %v962 = vunpack.c.l.b16 %v393
    %v963 = vunpack.c.h.b16 %v393
    %v964 = vunpack.c.l.b16 %v394
    %v965 = vunpack.c.h.b16 %v394
    %v966 = vunpack.c.l.b16 %v395
    %v967 = vunpack.c.h.b16 %v395
    %v968 = vunpack.c.l.b16 %v396
    %v969 = vunpack.c.h.b16 %v396
    %v970 = vunpack.c.l.b16 %v397
    %v971 = vunpack.c.h.b16 %v397
    %v972 = vunpack.c.l.b16 %v398
    %v973 = vunpack.c.h.b16 %v398
    %v974 = vunpack.c.l.b16 %v399
    %v975 = vunpack.c.h.b16 %v399
    %v976 = vunpack.c.l.b16 %v400
    %v977 = vunpack.c.h.b16 %v400
    %v978 = vunpack.c.l.b16 %v401
    %v979 = vunpack.c.h.b16 %v401
    %v980 = vunpack.c.l.b16 %v402
    %v981 = vunpack.c.h.b16 %v402
    %v982 = vunpack.c.l.b16 %v403
    %v983 = vunpack.c.h.b16 %v403
    %v984 = vunpack.c.l.b16 %v404
    %v985 = vunpack.c.h.b16 %v404
    %v986 = vunpack.c.l.b16 %v405
    %v987 = vunpack.c.h.b16 %v405
    %v988 = vunpack.c.l.b16 %v406
    %v989 = vunpack.c.h.b16 %v406
    %v990 = vunpack.c.l.b16 %v407
    %v991 = vunpack.c.h.b16 %v407
    %v992 = vunpack.c.l.b16 %v408
    %v993 = vunpack.c.h.b16 %v408
    %v994 = vunpack.c.l.b16 %v409
    %v995 = vunpack.c.h.b16 %v409
    %v996 = vunpack.c.l.b16 %v410
    %v997 = vunpack.c.h.b16 %v410
    %v998 = vunpack.c.l.b16 %v411
    %v999 = vunpack.c.h.b16 %v411
    %v1000 = vunpack.c.l.b16 %v412
    %v1001 = vunpack.c.h.b16 %v412
    %v1002 = vunpack.c.l.b16 %v413
    %v1003 = vunpack.c.h.b16 %v413
    %v1004 = vunpack.c.l.b16 %v414
    %v1005 = vunpack.c.h.b16 %v414
    %v1006 = vunpack.c.l.b16 %v415
    %v1007 = vunpack.c.h.b16 %v415
    %v1008 = vunpack.c.l.b16 %v416
    %v1009 = vunpack.c.h.b16 %v416
    %v1010 = vunpack.c.l.b16 %v417
    %v1011 = vunpack.c.h.b16 %v417
    %v1012 = vunpack.c.l.b16 %v418
    %v1013 = vunpack.c.h.b16 %v418
    %v1014 = vunpack.c.l.b16 %v419
    %v1015 = vunpack.c.h.b16 %v419
    %v1016 = vunpack.c.l.b16 %v420
    %v1017 = vunpack.c.h.b16 %v420
    %v1018 = vunpack.c.l.b16 %v421
    %v1019 = vunpack.c.h.b16 %v421
    %v1020 = vunpack.c.l.b16 %v422
    %v1021 = vunpack.c.h.b16 %v422
    %v1022 = vunpack.c.l.b16 %v423
    %v1023 = vunpack.c.h.b16 %v423
    %v1024 = vunpack.c.l.b16 %v424
    %v1025 = vunpack.c.h.b16 %v424
    %v1026 = vunpack.c.l.b16 %v425
    %v1027 = vunpack.c.h.b16 %v425
    %v1028 = vunpack.c.l.b16 %v426
    %v1029 = vunpack.c.h.b16 %v426
    %v1030 = vunpack.c.l.b16 %v427
    %v1031 = vunpack.c.h.b16 %v427
    %v1032 = vunpack.c.l.b16 %v428
    %v1033 = vunpack.c.h.b16 %v428
    %v1034 = vunpack.c.l.b16 %v429
    %v1035 = vunpack.c.h.b16 %v429
    %v1036 = vunpack.c.l.b16 %v430
    %v1037 = vunpack.c.h.b16 %v430
    %v1038 = vunpack.c.l.b16 %v431
    %v1039 = vunpack.c.h.b16 %v431
    %v1040 = vunpack.c.l.b16 %v432
    %v1041 = vunpack.c.h.b16 %v432
    %v1042 = vunpack.c.l.b16 %v433
    %v1043 = vunpack.c.h.b16 %v433
    %v1044 = vunpack.c.l.b16 %v434
    %v1045 = vunpack.c.h.b16 %v434
    %v1046 = vunpack.c.l.b16 %v435
    %v1047 = vunpack.c.h.b16 %v435
    %v1048 = vunpack.c.l.b16 %v436
    %v1049 = vunpack.c.h.b16 %v436
    %v1050 = vunpack.c.l.b16 %v437
    %v1051 = vunpack.c.h.b16 %v437
    %v1052 = vunpack.c.l.b16 %v438
    %v1053 = vunpack.c.h.b16 %v438
    %v1054 = vunpack.c.l.b16 %v439
    %v1055 = vunpack.c.h.b16 %v439
    %v1056 = vunpack.c.l.b16 %v440
    %v1057 = vunpack.c.h.b16 %v440
    %v1058 = vunpack.c.l.b16 %v441
    %v1059 = vunpack.c.h.b16 %v441
    %v1060 = vunpack.c.l.b16 %v442
    %v1061 = vunpack.c.h.b16 %v442
    %v1062 = vunpack.c.l.b16 %v443
    %v1063 = vunpack.c.h.b16 %v443
    %v1064 = vunpack.c.l.b16 %v444
    %v1065 = vunpack.c.h.b16 %v444
    %v1066 = vunpack.c.l.b16 %v445
    %v1067 = vunpack.c.h.b16 %v445
    %v1068 = vunpack.c.l.b16 %v446
    %v1069 = vunpack.c.h.b16 %v446
    %v1070 = vunpack.c.l.b16 %v447
    %v1071 = vunpack.c.h.b16 %v447
    %v1072 = vunpack.c.l.b16 %v448
    %v1073 = vunpack.c.h.b16 %v448
    %v1074 = vunpack.c.l.b16 %v449
    %v1075 = vunpack.c.h.b16 %v449
    %v1076 = vunpack.c.l.b16 %v450
    %v1077 = vunpack.c.h.b16 %v450
    %v1078 = vunpack.c.l.b16 %v451
    %v1079 = vunpack.c.h.b16 %v451
    %v1080 = vunpack.c.l.b16 %v452
    %v1081 = vunpack.c.h.b16 %v452
    %v1082 = vunpack.c.l.b16 %v453
    %v1083 = vunpack.c.h.b16 %v453
    %v1084 = vunpack.c.l.b16 %v454
    %v1085 = vunpack.c.h.b16 %v454
    %v1086 = vunpack.c.l.b16 %v455
    %v1087 = vunpack.c.h.b16 %v455
    %v1088 = vunpack.c.l.b16 %v456
    %v1089 = vunpack.c.h.b16 %v456
    %v1090 = vunpack.c.l.b16 %v457
    %v1091 = vunpack.c.h.b16 %v457
    %v1092 = vunpack.c.l.b16 %v458
    %v1093 = vunpack.c.h.b16 %v458
    %v1094 = vpack.c.b16 %v714, %v710
    %v1095 = vpack.c.b16 %v715, %v711
    %v1096 = vpack.c.b16 %v716, %v712
    %v1097 = vpack.c.b16 %v717, %v713
    %v1098 = vpack.c.b16 %v722, %v718
    %v1099 = vpack.c.b16 %v723, %v719
    %v1100 = vpack.c.b16 %v724, %v720
    %v1101 = vpack.c.b16 %v725, %v721
    %v1102 = vpack.c.b16 %v730, %v726
    %v1103 = vpack.c.b16 %v731, %v727
    %v1104 = vpack.c.b16 %v732, %v728
    %v1105 = vpack.c.b16 %v733, %v729
    %v1106 = vpack.c.b16 %v738, %v734
    %v1107 = vpack.c.b16 %v739, %v735
    %v1108 = vpack.c.b16 %v740, %v736
    %v1109 = vpack.c.b16 %v741, %v737
    %v1110 = vpack.c.b16 %v746, %v742
    %v1111 = vpack.c.b16 %v747, %v743
    %v1112 = vpack.c.b16 %v748, %v744
    %v1113 = vpack.c.b16 %v749, %v745
    %v1114 = vpack.c.b16 %v754, %v750
    %v1115 = vpack.c.b16 %v755, %v751
    %v1116 = vpack.c.b16 %v756, %v752
    %v1117 = vpack.c.b16 %v757, %v753
    %v1118 = vpack.c.b16 %v762, %v758
    %v1119 = vpack.c.b16 %v763, %v759
    %v1120 = vpack.c.b16 %v764, %v760
    %v1121 = vpack.c.b16 %v765, %v761
    %v1122 = vpack.c.b16 %v770, %v766
    %v1123 = vpack.c.b16 %v771, %v767
    %v1124 = vpack.c.b16 %v772, %v768
    %v1125 = vpack.c.b16 %v773, %v769
    %v1126 = vpack.c.b16 %v778, %v774
    %v1127 = vpack.c.b16 %v779, %v775
    %v1128 = vpack.c.b16 %v780, %v776
    %v1129 = vpack.c.b16 %v781, %v777
    %v1130 = vpack.c.b16 %v786, %v782
    %v1131 = vpack.c.b16 %v787, %v783
    %v1132 = vpack.c.b16 %v788, %v784
    %v1133 = vpack.c.b16 %v789, %v785
    %v1134 = vpack.c.b16 %v794, %v790
    %v1135 = vpack.c.b16 %v795, %v791
    %v1136 = vpack.c.b16 %v796, %v792
    %v1137 = vpack.c.b16 %v797, %v793
    %v1138 = vpack.c.b16 %v802, %v798
    %v1139 = vpack.c.b16 %v803, %v799
    %v1140 = vpack.c.b16 %v804, %v800
    %v1141 = vpack.c.b16 %v805, %v801
    %v1142 = vpack.c.b16 %v810, %v806
    %v1143 = vpack.c.b16 %v811, %v807
    %v1144 = vpack.c.b16 %v812, %v808
    %v1145 = vpack.c.b16 %v813, %v809
    %v1146 = vpack.c.b16 %v818, %v814
    %v1147 = vpack.c.b16 %v819, %v815
    %v1148 = vpack.c.b16 %v820, %v816
    %v1149 = vpack.c.b16 %v821, %v817
    %v1150 = vpack.c.b16 %v826, %v822
    %v1151 = vpack.c.b16 %v827, %v823
    %v1152 = vpack.c.b16 %v828, %v824
    %v1153 = vpack.c.b16 %v829, %v825
    %v1154 = vpack.c.b16 %v834, %v830
    %v1155 = vpack.c.b16 %v835, %v831
    %v1156 = vpack.c.b16 %v836, %v832
    %v1157 = vpack.c.b16 %v837, %v833
    %v1158 = vpack.c.b16 %v842, %v838
    %v1159 = vpack.c.b16 %v843, %v839
    %v1160 = vpack.c.b16 %v844, %v840
    %v1161 = vpack.c.b16 %v845, %v841
    %v1162 = vpack.c.b16 %v850, %v846
    %v1163 = vpack.c.b16 %v851, %v847
    %v1164 = vpack.c.b16 %v852, %v848
    %v1165 = vpack.c.b16 %v853, %v849
    %v1166 = vpack.c.b16 %v858, %v854
    %v1167 = vpack.c.b16 %v859, %v855
    %v1168 = vpack.c.b16 %v860, %v856
    %v1169 = vpack.c.b16 %v861, %v857
    %v1170 = vpack.c.b16 %v866, %v862
    %v1171 = vpack.c.b16 %v867, %v863
    %v1172 = vpack.c.b16 %v868, %v864
    %v1173 = vpack.c.b16 %v869, %v865
    %v1174 = vpack.c.b16 %v874, %v870
    %v1175 = vpack.c.b16 %v875, %v871
    %v1176 = vpack.c.b16 %v876, %v872
    %v1177 = vpack.c.b16 %v877, %v873
    %v1178 = vpack.c.b16 %v882, %v878
    %v1179 = vpack.c.b16 %v883, %v879
    %v1180 = vpack.c.b16 %v884, %v880
    %v1181 = vpack.c.b16 %v885, %v881
    %v1182 = vpack.c.b16 %v890, %v886
    %v1183 = vpack.c.b16 %v891, %v887
    %v1184 = vpack.c.b16 %v892, %v888
    %v1185 = vpack.c.b16 %v893, %v889
    %v1186 = vpack.c.b16 %v898, %v894
    %v1187 = vpack.c.b16 %v899, %v895
    %v1188 = vpack.c.b16 %v900, %v896
    %v1189 = vpack.c.b16 %v901, %v897
    %v1190 = vpack.c.b16 %v906, %v902
    %v1191 = vpack.c.b16 %v907, %v903
    %v1192 = vpack.c.b16 %v908, %v904
    %v1193 = vpack.c.b16 %v909, %v905
    %v1194 = vpack.c.b16 %v914, %v910
    %v1195 = vpack.c.b16 %v915, %v911
    %v1196 = vpack.c.b16 %v916, %v912
    %v1197 = vpack.c.b16 %v917, %v913
    %v1198 = vpack.c.b16 %v922, %v918
    %v1199 = vpack.c.b16 %v923, %v919
    %v1200 = vpack.c.b16 %v924, %v920
    %v1201 = vpack.c.b16 %v925, %v921
    %v1202 = vpack.c.b16 %v930, %v926
    %v1203 = vpack.c.b16 %v931, %v927
    %v1204 = vpack.c.b16 %v932, %v928
    %v1205 = vpack.c.b16 %v933, %v929
    %v1206 = vpack.c.b16 %v938, %v934
    %v1207 = vpack.c.b16 %v939, %v935
    %v1208 = vpack.c.b16 %v940, %v936
    %v1209 = vpack.c.b16 %v941, %v937
    %v1210 = vpack.c.b16 %v946, %v942
    %v1211 = vpack.c.b16 %v947, %v943
    %v1212 = vpack.c.b16 %v948, %v944
    %v1213 = vpack.c.b16 %v949, %v945
    %v1214 = vpack.c.b16 %v954, %v950
    %v1215 = vpack.c.b16 %v955, %v951
    %v1216 = vpack.c.b16 %v956, %v952
    %v1217 = vpack.c.b16 %v957, %v953
    %v1218 = vpack.c.b16 %v962, %v958
    %v1219 = vpack.c.b16 %v963, %v959
    %v1220 = vpack.c.b16 %v964, %v960
    %v1221 = vpack.c.b16 %v965, %v961
    %v1222 = vpack.c.b16 %v970, %v966
    %v1223 = vpack.c.b16 %v971, %v967
    %v1224 = vpack.c.b16 %v972, %v968
    %v1225 = vpack.c.b16 %v973, %v969
    %v1226 = vpack.c.b16 %v978, %v974
    %v1227 = vpack.c.b16 %v979, %v975
    %v1228 = vpack.c.b16 %v980, %v976
    %v1229 = vpack.c.b16 %v981, %v977
    %v1230 = vpack.c.b16 %v986, %v982
    %v1231 = vpack.c.b16 %v987, %v983
    %v1232 = vpack.c.b16 %v988, %v984
    %v1233 = vpack.c.b16 %v989, %v985
    %v1234 = vpack.c.b16 %v994, %v990
    %v1235 = vpack.c.b16 %v995, %v991
    %v1236 = vpack.c.b16 %v996, %v992
    %v1237 = vpack.c.b16 %v997, %v993
    %v1238 = vpack.c.b16 %v1002, %v998
    %v1239 = vpack.c.b16 %v1003, %v999
    %v1240 = vpack.c.b16 %v1004, %v1000
    %v1241 = vpack.c.b16 %v1005, %v1001
    %v1242 = vpack.c.b16 %v1010, %v1006
    %v1243 = vpack.c.b16 %v1011, %v1007
    %v1244 = vpack.c.b16 %v1012, %v1008
    %v1245 = vpack.c.b16 %v1013, %v1009
    %v1246 = vpack.c.b16 %v1018, %v1014
    %v1247 = vpack.c.b16 %v1019, %v1015
    %v1248 = vpack.c.b16 %v1020, %v1016
    %v1249 = vpack.c.b16 %v1021, %v1017
    %v1250 = vpack.c.b16 %v1026, %v1022
    %v1251 = vpack.c.b16 %v1027, %v1023
    %v1252 = vpack.c.b16 %v1028, %v1024
    %v1253 = vpack.c.b16 %v1029, %v1025
    %v1254 = vpack.c.b16 %v1034, %v1030
    %v1255 = vpack.c.b16 %v1035, %v1031
    %v1256 = vpack.c.b16 %v1036, %v1032
    %v1257 = vpack.c.b16 %v1037, %v1033
    %v1258 = vpack.c.b16 %v1042, %v1038
    %v1259 = vpack.c.b16 %v1043, %v1039
    %v1260 = vpack.c.b16 %v1044, %v1040
    %v1261 = vpack.c.b16 %v1045, %v1041
    %v1262 = vpack.c.b16 %v1050, %v1046
    %v1263 = vpack.c.b16 %v1051, %v1047
    %v1264 = vpack.c.b16 %v1052, %v1048
    %v1265 = vpack.c.b16 %v1053, %v1049
    %v1266 = vpack.c.b16 %v1058, %v1054
    %v1267 = vpack.c.b16 %v1059, %v1055
    %v1268 = vpack.c.b16 %v1060, %v1056
    %v1269 = vpack.c.b16 %v1061, %v1057
    %v1270 = vpack.c.b16 %v1066, %v1062
    %v1271 = vpack.c.b16 %v1067, %v1063
    %v1272 = vpack.c.b16 %v1068, %v1064
    %v1273 = vpack.c.b16 %v1069, %v1065
    %v1274 = vpack.c.b16 %v1074, %v1070
    %v1275 = vpack.c.b16 %v1075, %v1071
    %v1276 = vpack.c.b16 %v1076, %v1072
    %v1277 = vpack.c.b16 %v1077, %v1073
    %v1278 = vpack.c.b16 %v1082, %v1078
    %v1279 = vpack.c.b16 %v1083, %v1079
    %v1280 = vpack.c.b16 %v1084, %v1080
    %v1281 = vpack.c.b16 %v1085, %v1081
    %v1282 = vpack.c.b16 %v1090, %v1086
    %v1283 = vpack.c.b16 %v1091, %v1087
    %v1284 = vpack.c.b16 %v1092, %v1088
    %v1285 = vpack.c.b16 %v1093, %v1089
    %1478 = vmatpush.bf16.msra.mxu0 %v1122
    %1479 = vmatpush.bf16.msra.mxu0 %v1118
    %1480 = vmatpush.bf16.msra.mxu0 %v1114
    %1481 = vmatpush.bf16.msra.mxu0 %v1110
    %1482 = vmatpush.bf16.msra.mxu0 %v1106
    %1483 = vmatpush.bf16.msra.mxu0 %v1102
    %1484 = vmatpush.bf16.msra.mxu0 %v1098
    %1485 = vmatpush.bf16.msra.mxu0 %v1094
    %1486 = vmatmul.bf16.gmra.mxu0 %v506
    %v1487 = vpop.f32.mrf.mxu0
    %v1488 = vadd.f32 %v461, %v1487
    %v1489 = vpop.f32.mrf.mxu0
    %1490 = vdwg.mxu0
    %1491 = vmatpush.bf16.msra.mxu0 %v1154
    %1492 = vmatpush.bf16.msra.mxu0 %v1150
    %1493 = vmatpush.bf16.msra.mxu0 %v1146
    %1494 = vmatpush.bf16.msra.mxu0 %v1142
    %1495 = vmatpush.bf16.msra.mxu0 %v1138
    %1496 = vmatpush.bf16.msra.mxu0 %v1134
    %1497 = vmatpush.bf16.msra.mxu0 %v1130
    %1498 = vmatpush.bf16.msra.mxu0 %v1126
    %1499 = vmatmul.bf16.gmra.mxu0 %v507
    %v1500 = vpop.f32.mrf.mxu0
    %v1501 = vadd.f32 %v1488, %v1500
    %v1502 = vpop.f32.mrf.mxu0
    %1503 = vdwg.mxu0
    %1504 = vmatpush.bf16.msra.mxu0 %v1186
    %1505 = vmatpush.bf16.msra.mxu0 %v1182
    %1506 = vmatpush.bf16.msra.mxu0 %v1178
    %1507 = vmatpush.bf16.msra.mxu0 %v1174
    %1508 = vmatpush.bf16.msra.mxu0 %v1170
    %1509 = vmatpush.bf16.msra.mxu0 %v1166
    %1510 = vmatpush.bf16.msra.mxu0 %v1162
    %1511 = vmatpush.bf16.msra.mxu0 %v1158
    %1512 = vmatmul.bf16.gmra.mxu0 %v508
    %v1513 = vpop.f32.mrf.mxu0
    %v1514 = vadd.f32 %v1501, %v1513
    %v1515 = vpop.f32.mrf.mxu0
    %1516 = vdwg.mxu0
    %1517 = vmatpush.bf16.msra.mxu0 %v1218
    %1518 = vmatpush.bf16.msra.mxu0 %v1214
    %1519 = vmatpush.bf16.msra.mxu0 %v1210
    %1520 = vmatpush.bf16.msra.mxu0 %v1206
    %1521 = vmatpush.bf16.msra.mxu0 %v1202
    %1522 = vmatpush.bf16.msra.mxu0 %v1198
    %1523 = vmatpush.bf16.msra.mxu0 %v1194
    %1524 = vmatpush.bf16.msra.mxu0 %v1190
    %1525 = vmatmul.bf16.gmra.mxu0 %v509
    %v1526 = vpop.f32.mrf.mxu0
    %v1527 = vadd.f32 %v1514, %v1526
    %v1528 = vpop.f32.mrf.mxu0
    %1529 = vdwg.mxu0
    %1530 = vmatpush.bf16.msra.mxu0 %v1250
    %1531 = vmatpush.bf16.msra.mxu0 %v1246
    %1532 = vmatpush.bf16.msra.mxu0 %v1242
    %1533 = vmatpush.bf16.msra.mxu0 %v1238
    %1534 = vmatpush.bf16.msra.mxu0 %v1234
    %1535 = vmatpush.bf16.msra.mxu0 %v1230
    %1536 = vmatpush.bf16.msra.mxu0 %v1226
    %1537 = vmatpush.bf16.msra.mxu0 %v1222
    %1538 = vmatmul.bf16.gmra.mxu0 %v510
    %v1539 = vpop.f32.mrf.mxu0
    %v1540 = vadd.f32 %v1527, %v1539
    %v1541 = vpop.f32.mrf.mxu0
    %1542 = vdwg.mxu0
    %1543 = vmatpush.bf16.msra.mxu0 %v1282
    %1544 = vmatpush.bf16.msra.mxu0 %v1278
    %1545 = vmatpush.bf16.msra.mxu0 %v1274
    %1546 = vmatpush.bf16.msra.mxu0 %v1270
    %1547 = vmatpush.bf16.msra.mxu0 %v1266
    %1548 = vmatpush.bf16.msra.mxu0 %v1262
    %1549 = vmatpush.bf16.msra.mxu0 %v1258
    %1550 = vmatpush.bf16.msra.mxu0 %v1254
    %1551 = vmatmul.bf16.gmra.mxu0 %v511
    %v1552 = vpop.f32.mrf.mxu0
    %v1553 = vadd.f32 %v1540, %v1552
    %v1554 = vpop.f32.mrf.mxu0
    %1555 = vdwg.mxu0
    %1556 = vmatpush.bf16.msra.mxu0 %v1123
    %1557 = vmatpush.bf16.msra.mxu0 %v1119
    %1558 = vmatpush.bf16.msra.mxu0 %v1115
    %1559 = vmatpush.bf16.msra.mxu0 %v1111
    %1560 = vmatpush.bf16.msra.mxu0 %v1107
    %1561 = vmatpush.bf16.msra.mxu0 %v1103
    %1562 = vmatpush.bf16.msra.mxu0 %v1099
    %1563 = vmatpush.bf16.msra.mxu0 %v1095
    %1564 = vmatmul.bf16.gmra.mxu0 %v506
    %v1565 = vpop.f32.mrf.mxu0
    %v1566 = vadd.f32 %v462, %v1565
    %v1567 = vpop.f32.mrf.mxu0
    %1568 = vdwg.mxu0
    %1569 = vmatpush.bf16.msra.mxu0 %v1155
    %1570 = vmatpush.bf16.msra.mxu0 %v1151
    %1571 = vmatpush.bf16.msra.mxu0 %v1147
    %1572 = vmatpush.bf16.msra.mxu0 %v1143
    %1573 = vmatpush.bf16.msra.mxu0 %v1139
    %1574 = vmatpush.bf16.msra.mxu0 %v1135
    %1575 = vmatpush.bf16.msra.mxu0 %v1131
    %1576 = vmatpush.bf16.msra.mxu0 %v1127
    %1577 = vmatmul.bf16.gmra.mxu0 %v507
    %v1578 = vpop.f32.mrf.mxu0
    %v1579 = vadd.f32 %v1566, %v1578
    %v1580 = vpop.f32.mrf.mxu0
    %1581 = vdwg.mxu0
    %1582 = vmatpush.bf16.msra.mxu0 %v1187
    %1583 = vmatpush.bf16.msra.mxu0 %v1183
    %1584 = vmatpush.bf16.msra.mxu0 %v1179
    %1585 = vmatpush.bf16.msra.mxu0 %v1175
    %1586 = vmatpush.bf16.msra.mxu0 %v1171
    %1587 = vmatpush.bf16.msra.mxu0 %v1167
    %1588 = vmatpush.bf16.msra.mxu0 %v1163
    %1589 = vmatpush.bf16.msra.mxu0 %v1159
    %1590 = vmatmul.bf16.gmra.mxu0 %v508
    %v1591 = vpop.f32.mrf.mxu0
    %v1592 = vadd.f32 %v1579, %v1591
    %v1593 = vpop.f32.mrf.mxu0
    %1594 = vdwg.mxu0
    %1595 = vmatpush.bf16.msra.mxu0 %v1219
    %1596 = vmatpush.bf16.msra.mxu0 %v1215
    %1597 = vmatpush.bf16.msra.mxu0 %v1211
    %1598 = vmatpush.bf16.msra.mxu0 %v1207
    %1599 = vmatpush.bf16.msra.mxu0 %v1203
    %1600 = vmatpush.bf16.msra.mxu0 %v1199
    %1601 = vmatpush.bf16.msra.mxu0 %v1195
    %1602 = vmatpush.bf16.msra.mxu0 %v1191
    %1603 = vmatmul.bf16.gmra.mxu0 %v509
    %v1604 = vpop.f32.mrf.mxu0
    %v1605 = vadd.f32 %v1592, %v1604
    %v1606 = vpop.f32.mrf.mxu0
    %1607 = vdwg.mxu0
    %1608 = vmatpush.bf16.msra.mxu0 %v1251
    %1609 = vmatpush.bf16.msra.mxu0 %v1247
    %1610 = vmatpush.bf16.msra.mxu0 %v1243
    %1611 = vmatpush.bf16.msra.mxu0 %v1239
    %1612 = vmatpush.bf16.msra.mxu0 %v1235
    %1613 = vmatpush.bf16.msra.mxu0 %v1231
    %1614 = vmatpush.bf16.msra.mxu0 %v1227
    %1615 = vmatpush.bf16.msra.mxu0 %v1223
    %1616 = vmatmul.bf16.gmra.mxu0 %v510
    %v1617 = vpop.f32.mrf.mxu0
    %v1618 = vadd.f32 %v1605, %v1617
    %v1619 = vpop.f32.mrf.mxu0
    %1620 = vdwg.mxu0
    %1621 = vmatpush.bf16.msra.mxu0 %v1283
    %1622 = vmatpush.bf16.msra.mxu0 %v1279
    %1623 = vmatpush.bf16.msra.mxu0 %v1275
    %1624 = vmatpush.bf16.msra.mxu0 %v1271
    %1625 = vmatpush.bf16.msra.mxu0 %v1267
    %1626 = vmatpush.bf16.msra.mxu0 %v1263
    %1627 = vmatpush.bf16.msra.mxu0 %v1259
    %1628 = vmatpush.bf16.msra.mxu0 %v1255
    %1629 = vmatmul.bf16.gmra.mxu0 %v511
    %v1630 = vpop.f32.mrf.mxu0
    %v1631 = vadd.f32 %v1618, %v1630
    %v1632 = vpop.f32.mrf.mxu0
    %1633 = vdwg.mxu0
    %1634 = vmatpush.bf16.msra.mxu0 %v1124
    %1635 = vmatpush.bf16.msra.mxu0 %v1120
    %1636 = vmatpush.bf16.msra.mxu0 %v1116
    %1637 = vmatpush.bf16.msra.mxu0 %v1112
    %1638 = vmatpush.bf16.msra.mxu0 %v1108
    %1639 = vmatpush.bf16.msra.mxu0 %v1104
    %1640 = vmatpush.bf16.msra.mxu0 %v1100
    %1641 = vmatpush.bf16.msra.mxu0 %v1096
    %1642 = vmatmul.bf16.gmra.mxu0 %v506
    %v1643 = vpop.f32.mrf.mxu0
    %v1644 = vadd.f32 %v463, %v1643
    %v1645 = vpop.f32.mrf.mxu0
    %1646 = vdwg.mxu0
    %1647 = vmatpush.bf16.msra.mxu0 %v1156
    %1648 = vmatpush.bf16.msra.mxu0 %v1152
    %1649 = vmatpush.bf16.msra.mxu0 %v1148
    %1650 = vmatpush.bf16.msra.mxu0 %v1144
    %1651 = vmatpush.bf16.msra.mxu0 %v1140
    %1652 = vmatpush.bf16.msra.mxu0 %v1136
    %1653 = vmatpush.bf16.msra.mxu0 %v1132
    %1654 = vmatpush.bf16.msra.mxu0 %v1128
    %1655 = vmatmul.bf16.gmra.mxu0 %v507
    %v1656 = vpop.f32.mrf.mxu0
    %v1657 = vadd.f32 %v1644, %v1656
    %v1658 = vpop.f32.mrf.mxu0
    %1659 = vdwg.mxu0
    %1660 = vmatpush.bf16.msra.mxu0 %v1188
    %1661 = vmatpush.bf16.msra.mxu0 %v1184
    %1662 = vmatpush.bf16.msra.mxu0 %v1180
    %1663 = vmatpush.bf16.msra.mxu0 %v1176
    %1664 = vmatpush.bf16.msra.mxu0 %v1172
    %1665 = vmatpush.bf16.msra.mxu0 %v1168
    %1666 = vmatpush.bf16.msra.mxu0 %v1164
    %1667 = vmatpush.bf16.msra.mxu0 %v1160
    %1668 = vmatmul.bf16.gmra.mxu0 %v508
    %v1669 = vpop.f32.mrf.mxu0
    %v1670 = vadd.f32 %v1657, %v1669
    %v1671 = vpop.f32.mrf.mxu0
    %1672 = vdwg.mxu0
    %1673 = vmatpush.bf16.msra.mxu0 %v1220
    %1674 = vmatpush.bf16.msra.mxu0 %v1216
    %1675 = vmatpush.bf16.msra.mxu0 %v1212
    %1676 = vmatpush.bf16.msra.mxu0 %v1208
    %1677 = vmatpush.bf16.msra.mxu0 %v1204
    %1678 = vmatpush.bf16.msra.mxu0 %v1200
    %1679 = vmatpush.bf16.msra.mxu0 %v1196
    %1680 = vmatpush.bf16.msra.mxu0 %v1192
    %1681 = vmatmul.bf16.gmra.mxu0 %v509
    %v1682 = vpop.f32.mrf.mxu0
    %v1683 = vadd.f32 %v1670, %v1682
    %v1684 = vpop.f32.mrf.mxu0
    %1685 = vdwg.mxu0
    %1686 = vmatpush.bf16.msra.mxu0 %v1252
    %1687 = vmatpush.bf16.msra.mxu0 %v1248
    %1688 = vmatpush.bf16.msra.mxu0 %v1244
    %1689 = vmatpush.bf16.msra.mxu0 %v1240
    %1690 = vmatpush.bf16.msra.mxu0 %v1236
    %1691 = vmatpush.bf16.msra.mxu0 %v1232
    %1692 = vmatpush.bf16.msra.mxu0 %v1228
    %1693 = vmatpush.bf16.msra.mxu0 %v1224
    %1694 = vmatmul.bf16.gmra.mxu0 %v510
    %v1695 = vpop.f32.mrf.mxu0
    %v1696 = vadd.f32 %v1683, %v1695
    %v1697 = vpop.f32.mrf.mxu0
    %1698 = vdwg.mxu0
    %1699 = vmatpush.bf16.msra.mxu0 %v1284
    %1700 = vmatpush.bf16.msra.mxu0 %v1280
    %1701 = vmatpush.bf16.msra.mxu0 %v1276
    %1702 = vmatpush.bf16.msra.mxu0 %v1272
    %1703 = vmatpush.bf16.msra.mxu0 %v1268
    %1704 = vmatpush.bf16.msra.mxu0 %v1264
    %1705 = vmatpush.bf16.msra.mxu0 %v1260
    %1706 = vmatpush.bf16.msra.mxu0 %v1256
    %1707 = vmatmul.bf16.gmra.mxu0 %v511
    %v1708 = vpop.f32.mrf.mxu0
    %v1709 = vadd.f32 %v1696, %v1708
    %v1710 = vpop.f32.mrf.mxu0
    %1711 = vdwg.mxu0
    %1712 = vmatpush.bf16.msra.mxu0 %v1125
    %1713 = vmatpush.bf16.msra.mxu0 %v1121
    %1714 = vmatpush.bf16.msra.mxu0 %v1117
    %1715 = vmatpush.bf16.msra.mxu0 %v1113
    %1716 = vmatpush.bf16.msra.mxu0 %v1109
    %1717 = vmatpush.bf16.msra.mxu0 %v1105
    %1718 = vmatpush.bf16.msra.mxu0 %v1101
    %1719 = vmatpush.bf16.msra.mxu0 %v1097
    %1720 = vmatmul.bf16.gmra.mxu0 %v506
    %v1721 = vpop.f32.mrf.mxu0
    %v1722 = vadd.f32 %v464, %v1721
    %v1723 = vpop.f32.mrf.mxu0
    %1724 = vdwg.mxu0
    %1725 = vmatpush.bf16.msra.mxu0 %v1157
    %1726 = vmatpush.bf16.msra.mxu0 %v1153
    %1727 = vmatpush.bf16.msra.mxu0 %v1149
    %1728 = vmatpush.bf16.msra.mxu0 %v1145
    %1729 = vmatpush.bf16.msra.mxu0 %v1141
    %1730 = vmatpush.bf16.msra.mxu0 %v1137
    %1731 = vmatpush.bf16.msra.mxu0 %v1133
    %1732 = vmatpush.bf16.msra.mxu0 %v1129
    %1733 = vmatmul.bf16.gmra.mxu0 %v507
    %v1734 = vpop.f32.mrf.mxu0
    %v1735 = vadd.f32 %v1722, %v1734
    %v1736 = vpop.f32.mrf.mxu0
    %1737 = vdwg.mxu0
    %1738 = vmatpush.bf16.msra.mxu0 %v1189
    %1739 = vmatpush.bf16.msra.mxu0 %v1185
    %1740 = vmatpush.bf16.msra.mxu0 %v1181
    %1741 = vmatpush.bf16.msra.mxu0 %v1177
    %1742 = vmatpush.bf16.msra.mxu0 %v1173
    %1743 = vmatpush.bf16.msra.mxu0 %v1169
    %1744 = vmatpush.bf16.msra.mxu0 %v1165
    %1745 = vmatpush.bf16.msra.mxu0 %v1161
    %1746 = vmatmul.bf16.gmra.mxu0 %v508
    %v1747 = vpop.f32.mrf.mxu0
    %v1748 = vadd.f32 %v1735, %v1747
    %v1749 = vpop.f32.mrf.mxu0
    %1750 = vdwg.mxu0
    %1751 = vmatpush.bf16.msra.mxu0 %v1221
    %1752 = vmatpush.bf16.msra.mxu0 %v1217
    %1753 = vmatpush.bf16.msra.mxu0 %v1213
    %1754 = vmatpush.bf16.msra.mxu0 %v1209
    %1755 = vmatpush.bf16.msra.mxu0 %v1205
    %1756 = vmatpush.bf16.msra.mxu0 %v1201
    %1757 = vmatpush.bf16.msra.mxu0 %v1197
    %1758 = vmatpush.bf16.msra.mxu0 %v1193
    %1759 = vmatmul.bf16.gmra.mxu0 %v509
    %v1760 = vpop.f32.mrf.mxu0
    %v1761 = vadd.f32 %v1748, %v1760
    %v1762 = vpop.f32.mrf.mxu0
    %1763 = vdwg.mxu0
    %1764 = vmatpush.bf16.msra.mxu0 %v1253
    %1765 = vmatpush.bf16.msra.mxu0 %v1249
    %1766 = vmatpush.bf16.msra.mxu0 %v1245
    %1767 = vmatpush.bf16.msra.mxu0 %v1241
    %1768 = vmatpush.bf16.msra.mxu0 %v1237
    %1769 = vmatpush.bf16.msra.mxu0 %v1233
    %1770 = vmatpush.bf16.msra.mxu0 %v1229
    %1771 = vmatpush.bf16.msra.mxu0 %v1225
    %1772 = vmatmul.bf16.gmra.mxu0 %v510
    %v1773 = vpop.f32.mrf.mxu0
    %v1774 = vadd.f32 %v1761, %v1773
    %v1775 = vpop.f32.mrf.mxu0
    %1776 = vdwg.mxu0
    %1777 = vmatpush.bf16.msra.mxu0 %v1285
    %1778 = vmatpush.bf16.msra.mxu0 %v1281
    %1779 = vmatpush.bf16.msra.mxu0 %v1277
    %1780 = vmatpush.bf16.msra.mxu0 %v1273
    %1781 = vmatpush.bf16.msra.mxu0 %v1269
    %1782 = vmatpush.bf16.msra.mxu0 %v1265
    %1783 = vmatpush.bf16.msra.mxu0 %v1261
    %1784 = vmatpush.bf16.msra.mxu0 %v1257
    %1785 = vmatmul.bf16.gmra.mxu0 %v511
    %v1786 = vpop.f32.mrf.mxu0
    %v1787 = vadd.f32 %v1774, %v1786
    %v1788 = vpop.f32.mrf.mxu0
    %1789 = vdwg.mxu0
    %v1790 = vpack.c.bf16 %v1553, %v1553
    %v1791 = vpack.c.bf16 %v1631, %v1631
    %v1792 = vpack.c.bf16 %v1709, %v1709
    %v1793 = vpack.c.bf16 %v1787, %v1787
    %v1794 = vld [vmem:[#allocation6] sm:$0xff]
    %v1795 = vld [vmem:[#allocation6 + $0x8] sm:$0xff]
    %v1796 = vld [vmem:[#allocation6 + $0x10] sm:$0xff]
    %v1797 = vld [vmem:[#allocation6 + $0x18] sm:$0xff]
    %v1798 = vld [vmem:[#allocation6 + $0x20] sm:$0xff]
    %v1799 = vld [vmem:[#allocation6 + $0x28] sm:$0xff]
    %v1800 = vld [vmem:[#allocation6 + $0x30] sm:$0xff]
    %v1801 = vld [vmem:[#allocation6 + $0x38] sm:$0xff]
    %v1802 = vld [vmem:[#allocation6 + $0x40] sm:$0xff]
    %v1803 = vld [vmem:[#allocation6 + $0x48] sm:$0xff]
    %v1804 = vld [vmem:[#allocation6 + $0x50] sm:$0xff]
    %v1805 = vld [vmem:[#allocation6 + $0x58] sm:$0xff]
    %v1806 = vld [vmem:[#allocation6 + $0x60] sm:$0xff]
    %v1807 = vld [vmem:[#allocation6 + $0x68] sm:$0xff]
    %v1808 = vld [vmem:[#allocation6 + $0x70] sm:$0xff]
    %v1809 = vld [vmem:[#allocation6 + $0x78] sm:$0xff]
    %v1810 = vld [vmem:[#allocation6 + $0x80] sm:$0xff]
    %v1811 = vld [vmem:[#allocation6 + $0x88] sm:$0xff]
    %v1812 = vld [vmem:[#allocation6 + $0x90] sm:$0xff]
    %v1813 = vld [vmem:[#allocation6 + $0x98] sm:$0xff]
    %v1814 = vld [vmem:[#allocation6 + $0xa0] sm:$0xff]
    %v1815 = vld [vmem:[#allocation6 + $0xa8] sm:$0xff]
    %v1816 = vld [vmem:[#allocation6 + $0xb0] sm:$0xff]
    %v1817 = vld [vmem:[#allocation6 + $0xb8] sm:$0xff]
    %v1818 = vld [vmem:[#allocation6 + $0xc0] sm:$0xff]
    %v1819 = vld [vmem:[#allocation6 + $0xc8] sm:$0xff]
    %v1820 = vld [vmem:[#allocation6 + $0xd0] sm:$0xff]
    %v1821 = vld [vmem:[#allocation6 + $0xd8] sm:$0xff]
    %v1822 = vld [vmem:[#allocation6 + $0xe0] sm:$0xff]
    %v1823 = vld [vmem:[#allocation6 + $0xe8] sm:$0xff]
    %v1824 = vld [vmem:[#allocation6 + $0xf0] sm:$0xff]
    %v1825 = vld [vmem:[#allocation6 + $0xf8] sm:$0xff]
    %v1826 = vld [vmem:[#allocation6 + $0x100] sm:$0xff]
    %v1827 = vld [vmem:[#allocation6 + $0x108] sm:$0xff]
    %v1828 = vld [vmem:[#allocation6 + $0x110] sm:$0xff]
    %v1829 = vld [vmem:[#allocation6 + $0x118] sm:$0xff]
    %v1830 = vld [vmem:[#allocation6 + $0x120] sm:$0xff]
    %v1831 = vld [vmem:[#allocation6 + $0x128] sm:$0xff]
    %v1832 = vld [vmem:[#allocation6 + $0x130] sm:$0xff]
    %v1833 = vld [vmem:[#allocation6 + $0x138] sm:$0xff]
    %v1834 = vld [vmem:[#allocation6 + $0x140] sm:$0xff]
    %v1835 = vld [vmem:[#allocation6 + $0x148] sm:$0xff]
    %v1836 = vld [vmem:[#allocation6 + $0x150] sm:$0xff]
    %v1837 = vld [vmem:[#allocation6 + $0x158] sm:$0xff]
    %v1838 = vld [vmem:[#allocation6 + $0x160] sm:$0xff]
    %v1839 = vld [vmem:[#allocation6 + $0x168] sm:$0xff]
    %v1840 = vld [vmem:[#allocation6 + $0x170] sm:$0xff]
    %v1841 = vld [vmem:[#allocation6 + $0x178] sm:$0xff]
    %v1842 = vld [vmem:[#allocation6 + $0x180] sm:$0xff]
    %v1843 = vld [vmem:[#allocation6 + $0x188] sm:$0xff]
    %v1844 = vld [vmem:[#allocation6 + $0x190] sm:$0xff]
    %v1845 = vld [vmem:[#allocation6 + $0x198] sm:$0xff]
    %v1846 = vld [vmem:[#allocation6 + $0x1a0] sm:$0xff]
    %v1847 = vld [vmem:[#allocation6 + $0x1a8] sm:$0xff]
    %v1848 = vld [vmem:[#allocation6 + $0x1b0] sm:$0xff]
    %v1849 = vld [vmem:[#allocation6 + $0x1b8] sm:$0xff]
    %v1850 = vld [vmem:[#allocation6 + $0x1c0] sm:$0xff]
    %v1851 = vld [vmem:[#allocation6 + $0x1c8] sm:$0xff]
    %v1852 = vld [vmem:[#allocation6 + $0x1d0] sm:$0xff]
    %v1853 = vld [vmem:[#allocation6 + $0x1d8] sm:$0xff]
    %v1854 = vld [vmem:[#allocation6 + $0x1e0] sm:$0xff]
    %v1855 = vld [vmem:[#allocation6 + $0x1e8] sm:$0xff]
    %v1856 = vld [vmem:[#allocation6 + $0x1f0] sm:$0xff]
    %v1857 = vld [vmem:[#allocation6 + $0x1f8] sm:$0xff]
    %v1858 = vld [vmem:[#allocation6 + $0x200] sm:$0xff]
    %v1859 = vld [vmem:[#allocation6 + $0x208] sm:$0xff]
    %v1860 = vld [vmem:[#allocation6 + $0x210] sm:$0xff]
    %v1861 = vld [vmem:[#allocation6 + $0x218] sm:$0xff]
    %v1862 = vld [vmem:[#allocation6 + $0x220] sm:$0xff]
    %v1863 = vld [vmem:[#allocation6 + $0x228] sm:$0xff]
    %v1864 = vld [vmem:[#allocation6 + $0x230] sm:$0xff]
    %v1865 = vld [vmem:[#allocation6 + $0x238] sm:$0xff]
    %v1866 = vld [vmem:[#allocation6 + $0x240] sm:$0xff]
    %v1867 = vld [vmem:[#allocation6 + $0x248] sm:$0xff]
    %v1868 = vld [vmem:[#allocation6 + $0x250] sm:$0xff]
    %v1869 = vld [vmem:[#allocation6 + $0x258] sm:$0xff]
    %v1870 = vld [vmem:[#allocation6 + $0x260] sm:$0xff]
    %v1871 = vld [vmem:[#allocation6 + $0x268] sm:$0xff]
    %v1872 = vld [vmem:[#allocation6 + $0x270] sm:$0xff]
    %v1873 = vld [vmem:[#allocation6 + $0x278] sm:$0xff]
    %v1874 = vld [vmem:[#allocation6 + $0x280] sm:$0xff]
    %v1875 = vld [vmem:[#allocation6 + $0x288] sm:$0xff]
    %v1876 = vld [vmem:[#allocation6 + $0x290] sm:$0xff]
    %v1877 = vld [vmem:[#allocation6 + $0x298] sm:$0xff]
    %v1878 = vld [vmem:[#allocation6 + $0x2a0] sm:$0xff]
    %v1879 = vld [vmem:[#allocation6 + $0x2a8] sm:$0xff]
    %v1880 = vld [vmem:[#allocation6 + $0x2b0] sm:$0xff]
    %v1881 = vld [vmem:[#allocation6 + $0x2b8] sm:$0xff]
    %v1882 = vld [vmem:[#allocation6 + $0x2c0] sm:$0xff]
    %v1883 = vld [vmem:[#allocation6 + $0x2c8] sm:$0xff]
    %v1884 = vld [vmem:[#allocation6 + $0x2d0] sm:$0xff]
    %v1885 = vld [vmem:[#allocation6 + $0x2d8] sm:$0xff]
    %v1886 = vld [vmem:[#allocation6 + $0x2e0] sm:$0xff]
    %v1887 = vld [vmem:[#allocation6 + $0x2e8] sm:$0xff]
    %v1888 = vld [vmem:[#allocation6 + $0x2f0] sm:$0xff]
    %v1889 = vld [vmem:[#allocation6 + $0x2f8] sm:$0xff]
    %v1890 = vld [vmem:[#allocation6 + $0x300] sm:$0xff]
    %v1891 = vld [vmem:[#allocation6 + $0x308] sm:$0xff]
    %v1892 = vld [vmem:[#allocation6 + $0x310] sm:$0xff]
    %v1893 = vld [vmem:[#allocation6 + $0x318] sm:$0xff]
    %v1894 = vld [vmem:[#allocation6 + $0x320] sm:$0xff]
    %v1895 = vld [vmem:[#allocation6 + $0x328] sm:$0xff]
    %v1896 = vld [vmem:[#allocation6 + $0x330] sm:$0xff]
    %v1897 = vld [vmem:[#allocation6 + $0x338] sm:$0xff]
    %v1898 = vld [vmem:[#allocation6 + $0x340] sm:$0xff]
    %v1899 = vld [vmem:[#allocation6 + $0x348] sm:$0xff]
    %v1900 = vld [vmem:[#allocation6 + $0x350] sm:$0xff]
    %v1901 = vld [vmem:[#allocation6 + $0x358] sm:$0xff]
    %v1902 = vld [vmem:[#allocation6 + $0x360] sm:$0xff]
    %v1903 = vld [vmem:[#allocation6 + $0x368] sm:$0xff]
    %v1904 = vld [vmem:[#allocation6 + $0x370] sm:$0xff]
    %v1905 = vld [vmem:[#allocation6 + $0x378] sm:$0xff]
    %v1906 = vld [vmem:[#allocation6 + $0x380] sm:$0xff]
    %v1907 = vld [vmem:[#allocation6 + $0x388] sm:$0xff]
    %v1908 = vld [vmem:[#allocation6 + $0x390] sm:$0xff]
    %v1909 = vld [vmem:[#allocation6 + $0x398] sm:$0xff]
    %v1910 = vld [vmem:[#allocation6 + $0x3a0] sm:$0xff]
    %v1911 = vld [vmem:[#allocation6 + $0x3a8] sm:$0xff]
    %v1912 = vld [vmem:[#allocation6 + $0x3b0] sm:$0xff]
    %v1913 = vld [vmem:[#allocation6 + $0x3b8] sm:$0xff]
    %v1914 = vld [vmem:[#allocation6 + $0x3c0] sm:$0xff]
    %v1915 = vld [vmem:[#allocation6 + $0x3c8] sm:$0xff]
    %v1916 = vld [vmem:[#allocation6 + $0x3d0] sm:$0xff]
    %v1917 = vld [vmem:[#allocation6 + $0x3d8] sm:$0xff]
    %v1918 = vld [vmem:[#allocation6 + $0x3e0] sm:$0xff]
    %v1919 = vld [vmem:[#allocation6 + $0x3e8] sm:$0xff]
    %v1920 = vld [vmem:[#allocation6 + $0x3f0] sm:$0xff]
    %v1921 = vld [vmem:[#allocation6 + $0x3f8] sm:$0xff]
    %v1922 = vld [vmem:[#allocation6 + $0x400] sm:$0xff]
    %v1923 = vld [vmem:[#allocation6 + $0x408] sm:$0xff]
    %v1924 = vld [vmem:[#allocation6 + $0x410] sm:$0xff]
    %v1925 = vld [vmem:[#allocation6 + $0x418] sm:$0xff]
    %v1926 = vld [vmem:[#allocation6 + $0x420] sm:$0xff]
    %v1927 = vld [vmem:[#allocation6 + $0x428] sm:$0xff]
    %v1928 = vld [vmem:[#allocation6 + $0x430] sm:$0xff]
    %v1929 = vld [vmem:[#allocation6 + $0x438] sm:$0xff]
    %v1930 = vld [vmem:[#allocation6 + $0x440] sm:$0xff]
    %v1931 = vld [vmem:[#allocation6 + $0x448] sm:$0xff]
    %v1932 = vld [vmem:[#allocation6 + $0x450] sm:$0xff]
    %v1933 = vld [vmem:[#allocation6 + $0x458] sm:$0xff]
    %v1934 = vld [vmem:[#allocation6 + $0x460] sm:$0xff]
    %v1935 = vld [vmem:[#allocation6 + $0x468] sm:$0xff]
    %v1936 = vld [vmem:[#allocation6 + $0x470] sm:$0xff]
    %v1937 = vld [vmem:[#allocation6 + $0x478] sm:$0xff]
    %v1938 = vld [vmem:[#allocation6 + $0x480] sm:$0xff]
    %v1939 = vld [vmem:[#allocation6 + $0x488] sm:$0xff]
    %v1940 = vld [vmem:[#allocation6 + $0x490] sm:$0xff]
    %v1941 = vld [vmem:[#allocation6 + $0x498] sm:$0xff]
    %v1942 = vld [vmem:[#allocation6 + $0x4a0] sm:$0xff]
    %v1943 = vld [vmem:[#allocation6 + $0x4a8] sm:$0xff]
    %v1944 = vld [vmem:[#allocation6 + $0x4b0] sm:$0xff]
    %v1945 = vld [vmem:[#allocation6 + $0x4b8] sm:$0xff]
    %v1946 = vld [vmem:[#allocation6 + $0x4c0] sm:$0xff]
    %v1947 = vld [vmem:[#allocation6 + $0x4c8] sm:$0xff]
    %v1948 = vld [vmem:[#allocation6 + $0x4d0] sm:$0xff]
    %v1949 = vld [vmem:[#allocation6 + $0x4d8] sm:$0xff]
    %v1950 = vld [vmem:[#allocation6 + $0x4e0] sm:$0xff]
    %v1951 = vld [vmem:[#allocation6 + $0x4e8] sm:$0xff]
    %v1952 = vld [vmem:[#allocation6 + $0x4f0] sm:$0xff]
    %v1953 = vld [vmem:[#allocation6 + $0x4f8] sm:$0xff]
    %v1954 = vld [vmem:[#allocation6 + $0x500] sm:$0xff]
    %v1955 = vld [vmem:[#allocation6 + $0x508] sm:$0xff]
    %v1956 = vld [vmem:[#allocation6 + $0x510] sm:$0xff]
    %v1957 = vld [vmem:[#allocation6 + $0x518] sm:$0xff]
    %v1958 = vld [vmem:[#allocation6 + $0x520] sm:$0xff]
    %v1959 = vld [vmem:[#allocation6 + $0x528] sm:$0xff]
    %v1960 = vld [vmem:[#allocation6 + $0x530] sm:$0xff]
    %v1961 = vld [vmem:[#allocation6 + $0x538] sm:$0xff]
    %v1962 = vld [vmem:[#allocation6 + $0x540] sm:$0xff]
    %v1963 = vld [vmem:[#allocation6 + $0x548] sm:$0xff]
    %v1964 = vld [vmem:[#allocation6 + $0x550] sm:$0xff]
    %v1965 = vld [vmem:[#allocation6 + $0x558] sm:$0xff]
    %v1966 = vld [vmem:[#allocation6 + $0x560] sm:$0xff]
    %v1967 = vld [vmem:[#allocation6 + $0x568] sm:$0xff]
    %v1968 = vld [vmem:[#allocation6 + $0x570] sm:$0xff]
    %v1969 = vld [vmem:[#allocation6 + $0x578] sm:$0xff]
    %v1970 = vld [vmem:[#allocation6 + $0x580] sm:$0xff]
    %v1971 = vld [vmem:[#allocation6 + $0x588] sm:$0xff]
    %v1972 = vld [vmem:[#allocation6 + $0x590] sm:$0xff]
    %v1973 = vld [vmem:[#allocation6 + $0x598] sm:$0xff]
    %v1974 = vld [vmem:[#allocation6 + $0x5a0] sm:$0xff]
    %v1975 = vld [vmem:[#allocation6 + $0x5a8] sm:$0xff]
    %v1976 = vld [vmem:[#allocation6 + $0x5b0] sm:$0xff]
    %v1977 = vld [vmem:[#allocation6 + $0x5b8] sm:$0xff]
    %v1978 = vld [vmem:[#allocation6 + $0x5c0] sm:$0xff]
    %v1979 = vld [vmem:[#allocation6 + $0x5c8] sm:$0xff]
    %v1980 = vld [vmem:[#allocation6 + $0x5d0] sm:$0xff]
    %v1981 = vld [vmem:[#allocation6 + $0x5d8] sm:$0xff]
    %v1982 = vld [vmem:[#allocation6 + $0x5e0] sm:$0xff]
    %v1983 = vld [vmem:[#allocation6 + $0x5e8] sm:$0xff]
    %v1984 = vld [vmem:[#allocation6 + $0x5f0] sm:$0xff]
    %v1985 = vld [vmem:[#allocation6 + $0x5f8] sm:$0xff]
    %v2178 = vunpack.c.l.b16 %v1794
    %v2179 = vunpack.c.h.b16 %v1794
    %v2180 = vunpack.c.l.b16 %v1795
    %v2181 = vunpack.c.h.b16 %v1795
    %v2182 = vunpack.c.l.b16 %v1796
    %v2183 = vunpack.c.h.b16 %v1796
    %v2184 = vunpack.c.l.b16 %v1797
    %v2185 = vunpack.c.h.b16 %v1797
    %v2186 = vunpack.c.l.b16 %v1798
    %v2187 = vunpack.c.h.b16 %v1798
    %v2188 = vunpack.c.l.b16 %v1799
    %v2189 = vunpack.c.h.b16 %v1799
    %v2190 = vunpack.c.l.b16 %v1800
    %v2191 = vunpack.c.h.b16 %v1800
    %v2192 = vunpack.c.l.b16 %v1801
    %v2193 = vunpack.c.h.b16 %v1801
    %v2194 = vunpack.c.l.b16 %v1802
    %v2195 = vunpack.c.h.b16 %v1802
    %v2196 = vunpack.c.l.b16 %v1803
    %v2197 = vunpack.c.h.b16 %v1803
    %v2198 = vunpack.c.l.b16 %v1804
    %v2199 = vunpack.c.h.b16 %v1804
    %v2200 = vunpack.c.l.b16 %v1805
    %v2201 = vunpack.c.h.b16 %v1805
    %v2202 = vunpack.c.l.b16 %v1806
    %v2203 = vunpack.c.h.b16 %v1806
    %v2204 = vunpack.c.l.b16 %v1807
    %v2205 = vunpack.c.h.b16 %v1807
    %v2206 = vunpack.c.l.b16 %v1808
    %v2207 = vunpack.c.h.b16 %v1808
    %v2208 = vunpack.c.l.b16 %v1809
    %v2209 = vunpack.c.h.b16 %v1809
    %v2210 = vunpack.c.l.b16 %v1810
    %v2211 = vunpack.c.h.b16 %v1810
    %v2212 = vunpack.c.l.b16 %v1811
    %v2213 = vunpack.c.h.b16 %v1811
    %v2214 = vunpack.c.l.b16 %v1812
    %v2215 = vunpack.c.h.b16 %v1812
    %v2216 = vunpack.c.l.b16 %v1813
    %v2217 = vunpack.c.h.b16 %v1813
    %v2218 = vunpack.c.l.b16 %v1814
    %v2219 = vunpack.c.h.b16 %v1814
    %v2220 = vunpack.c.l.b16 %v1815
    %v2221 = vunpack.c.h.b16 %v1815
    %v2222 = vunpack.c.l.b16 %v1816
    %v2223 = vunpack.c.h.b16 %v1816
    %v2224 = vunpack.c.l.b16 %v1817
    %v2225 = vunpack.c.h.b16 %v1817
    %v2226 = vunpack.c.l.b16 %v1818
    %v2227 = vunpack.c.h.b16 %v1818
    %v2228 = vunpack.c.l.b16 %v1819
    %v2229 = vunpack.c.h.b16 %v1819
    %v2230 = vunpack.c.l.b16 %v1820
    %v2231 = vunpack.c.h.b16 %v1820
    %v2232 = vunpack.c.l.b16 %v1821
    %v2233 = vunpack.c.h.b16 %v1821
    %v2234 = vunpack.c.l.b16 %v1822
    %v2235 = vunpack.c.h.b16 %v1822
    %v2236 = vunpack.c.l.b16 %v1823
    %v2237 = vunpack.c.h.b16 %v1823
    %v2238 = vunpack.c.l.b16 %v1824
    %v2239 = vunpack.c.h.b16 %v1824
    %v2240 = vunpack.c.l.b16 %v1825
    %v2241 = vunpack.c.h.b16 %v1825
    %v2242 = vunpack.c.l.b16 %v1826
    %v2243 = vunpack.c.h.b16 %v1826
    %v2244 = vunpack.c.l.b16 %v1827
    %v2245 = vunpack.c.h.b16 %v1827
    %v2246 = vunpack.c.l.b16 %v1828
    %v2247 = vunpack.c.h.b16 %v1828
    %v2248 = vunpack.c.l.b16 %v1829
    %v2249 = vunpack.c.h.b16 %v1829
    %v2250 = vunpack.c.l.b16 %v1830
    %v2251 = vunpack.c.h.b16 %v1830
    %v2252 = vunpack.c.l.b16 %v1831
    %v2253 = vunpack.c.h.b16 %v1831
    %v2254 = vunpack.c.l.b16 %v1832
    %v2255 = vunpack.c.h.b16 %v1832
    %v2256 = vunpack.c.l.b16 %v1833
    %v2257 = vunpack.c.h.b16 %v1833
    %v2258 = vunpack.c.l.b16 %v1834
    %v2259 = vunpack.c.h.b16 %v1834
    %v2260 = vunpack.c.l.b16 %v1835
    %v2261 = vunpack.c.h.b16 %v1835
    %v2262 = vunpack.c.l.b16 %v1836
    %v2263 = vunpack.c.h.b16 %v1836
    %v2264 = vunpack.c.l.b16 %v1837
    %v2265 = vunpack.c.h.b16 %v1837
    %v2266 = vunpack.c.l.b16 %v1838
    %v2267 = vunpack.c.h.b16 %v1838
    %v2268 = vunpack.c.l.b16 %v1839
    %v2269 = vunpack.c.h.b16 %v1839
    %v2270 = vunpack.c.l.b16 %v1840
    %v2271 = vunpack.c.h.b16 %v1840
    %v2272 = vunpack.c.l.b16 %v1841
    %v2273 = vunpack.c.h.b16 %v1841
    %v2274 = vunpack.c.l.b16 %v1842
    %v2275 = vunpack.c.h.b16 %v1842
    %v2276 = vunpack.c.l.b16 %v1843
    %v2277 = vunpack.c.h.b16 %v1843
    %v2278 = vunpack.c.l.b16 %v1844
    %v2279 = vunpack.c.h.b16 %v1844
    %v2280 = vunpack.c.l.b16 %v1845
    %v2281 = vunpack.c.h.b16 %v1845
    %v2282 = vunpack.c.l.b16 %v1846
    %v2283 = vunpack.c.h.b16 %v1846
    %v2284 = vunpack.c.l.b16 %v1847
    %v2285 = vunpack.c.h.b16 %v1847
    %v2286 = vunpack.c.l.b16 %v1848
    %v2287 = vunpack.c.h.b16 %v1848
    %v2288 = vunpack.c.l.b16 %v1849
    %v2289 = vunpack.c.h.b16 %v1849
    %v2290 = vunpack.c.l.b16 %v1850
    %v2291 = vunpack.c.h.b16 %v1850
    %v2292 = vunpack.c.l.b16 %v1851
    %v2293 = vunpack.c.h.b16 %v1851
    %v2294 = vunpack.c.l.b16 %v1852
    %v2295 = vunpack.c.h.b16 %v1852
    %v2296 = vunpack.c.l.b16 %v1853
    %v2297 = vunpack.c.h.b16 %v1853
    %v2298 = vunpack.c.l.b16 %v1854
    %v2299 = vunpack.c.h.b16 %v1854
    %v2300 = vunpack.c.l.b16 %v1855
    %v2301 = vunpack.c.h.b16 %v1855
    %v2302 = vunpack.c.l.b16 %v1856
    %v2303 = vunpack.c.h.b16 %v1856
    %v2304 = vunpack.c.l.b16 %v1857
    %v2305 = vunpack.c.h.b16 %v1857
    %v2306 = vunpack.c.l.b16 %v1858
    %v2307 = vunpack.c.h.b16 %v1858
    %v2308 = vunpack.c.l.b16 %v1859
    %v2309 = vunpack.c.h.b16 %v1859
    %v2310 = vunpack.c.l.b16 %v1860
    %v2311 = vunpack.c.h.b16 %v1860
    %v2312 = vunpack.c.l.b16 %v1861
    %v2313 = vunpack.c.h.b16 %v1861
    %v2314 = vunpack.c.l.b16 %v1862
    %v2315 = vunpack.c.h.b16 %v1862
    %v2316 = vunpack.c.l.b16 %v1863
    %v2317 = vunpack.c.h.b16 %v1863
    %v2318 = vunpack.c.l.b16 %v1864
    %v2319 = vunpack.c.h.b16 %v1864
    %v2320 = vunpack.c.l.b16 %v1865
    %v2321 = vunpack.c.h.b16 %v1865
    %v2322 = vunpack.c.l.b16 %v1866
    %v2323 = vunpack.c.h.b16 %v1866
    %v2324 = vunpack.c.l.b16 %v1867
    %v2325 = vunpack.c.h.b16 %v1867
    %v2326 = vunpack.c.l.b16 %v1868
    %v2327 = vunpack.c.h.b16 %v1868
    %v2328 = vunpack.c.l.b16 %v1869
    %v2329 = vunpack.c.h.b16 %v1869
    %v2330 = vunpack.c.l.b16 %v1870
    %v2331 = vunpack.c.h.b16 %v1870
    %v2332 = vunpack.c.l.b16 %v1871
    %v2333 = vunpack.c.h.b16 %v1871
    %v2334 = vunpack.c.l.b16 %v1872
    %v2335 = vunpack.c.h.b16 %v1872
    %v2336 = vunpack.c.l.b16 %v1873
    %v2337 = vunpack.c.h.b16 %v1873
    %v2338 = vunpack.c.l.b16 %v1874
    %v2339 = vunpack.c.h.b16 %v1874
    %v2340 = vunpack.c.l.b16 %v1875
    %v2341 = vunpack.c.h.b16 %v1875
    %v2342 = vunpack.c.l.b16 %v1876
    %v2343 = vunpack.c.h.b16 %v1876
    %v2344 = vunpack.c.l.b16 %v1877
    %v2345 = vunpack.c.h.b16 %v1877
    %v2346 = vunpack.c.l.b16 %v1878
    %v2347 = vunpack.c.h.b16 %v1878
    %v2348 = vunpack.c.l.b16 %v1879
    %v2349 = vunpack.c.h.b16 %v1879
    %v2350 = vunpack.c.l.b16 %v1880
    %v2351 = vunpack.c.h.b16 %v1880
    %v2352 = vunpack.c.l.b16 %v1881
    %v2353 = vunpack.c.h.b16 %v1881
    %v2354 = vunpack.c.l.b16 %v1882
    %v2355 = vunpack.c.h.b16 %v1882
    %v2356 = vunpack.c.l.b16 %v1883
    %v2357 = vunpack.c.h.b16 %v1883
    %v2358 = vunpack.c.l.b16 %v1884
    %v2359 = vunpack.c.h.b16 %v1884
    %v2360 = vunpack.c.l.b16 %v1885
    %v2361 = vunpack.c.h.b16 %v1885
    %v2362 = vunpack.c.l.b16 %v1886
    %v2363 = vunpack.c.h.b16 %v1886
    %v2364 = vunpack.c.l.b16 %v1887
    %v2365 = vunpack.c.h.b16 %v1887
    %v2366 = vunpack.c.l.b16 %v1888
    %v2367 = vunpack.c.h.b16 %v1888
    %v2368 = vunpack.c.l.b16 %v1889
    %v2369 = vunpack.c.h.b16 %v1889
    %v2370 = vunpack.c.l.b16 %v1890
    %v2371 = vunpack.c.h.b16 %v1890
    %v2372 = vunpack.c.l.b16 %v1891
    %v2373 = vunpack.c.h.b16 %v1891
    %v2374 = vunpack.c.l.b16 %v1892
    %v2375 = vunpack.c.h.b16 %v1892
    %v2376 = vunpack.c.l.b16 %v1893
    %v2377 = vunpack.c.h.b16 %v1893
    %v2378 = vunpack.c.l.b16 %v1894
    %v2379 = vunpack.c.h.b16 %v1894
    %v2380 = vunpack.c.l.b16 %v1895
    %v2381 = vunpack.c.h.b16 %v1895
    %v2382 = vunpack.c.l.b16 %v1896
    %v2383 = vunpack.c.h.b16 %v1896
    %v2384 = vunpack.c.l.b16 %v1897
    %v2385 = vunpack.c.h.b16 %v1897
    %v2386 = vunpack.c.l.b16 %v1898
    %v2387 = vunpack.c.h.b16 %v1898
    %v2388 = vunpack.c.l.b16 %v1899
    %v2389 = vunpack.c.h.b16 %v1899
    %v2390 = vunpack.c.l.b16 %v1900
    %v2391 = vunpack.c.h.b16 %v1900
    %v2392 = vunpack.c.l.b16 %v1901
    %v2393 = vunpack.c.h.b16 %v1901
    %v2394 = vunpack.c.l.b16 %v1902
    %v2395 = vunpack.c.h.b16 %v1902
    %v2396 = vunpack.c.l.b16 %v1903
    %v2397 = vunpack.c.h.b16 %v1903
    %v2398 = vunpack.c.l.b16 %v1904
    %v2399 = vunpack.c.h.b16 %v1904
    %v2400 = vunpack.c.l.b16 %v1905
    %v2401 = vunpack.c.h.b16 %v1905
    %v2402 = vunpack.c.l.b16 %v1906
    %v2403 = vunpack.c.h.b16 %v1906
    %v2404 = vunpack.c.l.b16 %v1907
    %v2405 = vunpack.c.h.b16 %v1907
    %v2406 = vunpack.c.l.b16 %v1908
    %v2407 = vunpack.c.h.b16 %v1908
    %v2408 = vunpack.c.l.b16 %v1909
    %v2409 = vunpack.c.h.b16 %v1909
    %v2410 = vunpack.c.l.b16 %v1910
    %v2411 = vunpack.c.h.b16 %v1910
    %v2412 = vunpack.c.l.b16 %v1911
    %v2413 = vunpack.c.h.b16 %v1911
    %v2414 = vunpack.c.l.b16 %v1912
    %v2415 = vunpack.c.h.b16 %v1912
    %v2416 = vunpack.c.l.b16 %v1913
    %v2417 = vunpack.c.h.b16 %v1913
    %v2418 = vunpack.c.l.b16 %v1914
    %v2419 = vunpack.c.h.b16 %v1914
    %v2420 = vunpack.c.l.b16 %v1915
    %v2421 = vunpack.c.h.b16 %v1915
    %v2422 = vunpack.c.l.b16 %v1916
    %v2423 = vunpack.c.h.b16 %v1916
    %v2424 = vunpack.c.l.b16 %v1917
    %v2425 = vunpack.c.h.b16 %v1917
    %v2426 = vunpack.c.l.b16 %v1918
    %v2427 = vunpack.c.h.b16 %v1918
    %v2428 = vunpack.c.l.b16 %v1919
    %v2429 = vunpack.c.h.b16 %v1919
    %v2430 = vunpack.c.l.b16 %v1920
    %v2431 = vunpack.c.h.b16 %v1920
    %v2432 = vunpack.c.l.b16 %v1921
    %v2433 = vunpack.c.h.b16 %v1921
    %v2434 = vunpack.c.l.b16 %v1922
    %v2435 = vunpack.c.h.b16 %v1922
    %v2436 = vunpack.c.l.b16 %v1923
    %v2437 = vunpack.c.h.b16 %v1923
    %v2438 = vunpack.c.l.b16 %v1924
    %v2439 = vunpack.c.h.b16 %v1924
    %v2440 = vunpack.c.l.b16 %v1925
    %v2441 = vunpack.c.h.b16 %v1925
    %v2442 = vunpack.c.l.b16 %v1926
    %v2443 = vunpack.c.h.b16 %v1926
    %v2444 = vunpack.c.l.b16 %v1927
    %v2445 = vunpack.c.h.b16 %v1927
    %v2446 = vunpack.c.l.b16 %v1928
    %v2447 = vunpack.c.h.b16 %v1928
    %v2448 = vunpack.c.l.b16 %v1929
    %v2449 = vunpack.c.h.b16 %v1929
    %v2450 = vunpack.c.l.b16 %v1930
    %v2451 = vunpack.c.h.b16 %v1930
    %v2452 = vunpack.c.l.b16 %v1931
    %v2453 = vunpack.c.h.b16 %v1931
    %v2454 = vunpack.c.l.b16 %v1932
    %v2455 = vunpack.c.h.b16 %v1932
    %v2456 = vunpack.c.l.b16 %v1933
    %v2457 = vunpack.c.h.b16 %v1933
    %v2458 = vunpack.c.l.b16 %v1934
    %v2459 = vunpack.c.h.b16 %v1934
    %v2460 = vunpack.c.l.b16 %v1935
    %v2461 = vunpack.c.h.b16 %v1935
    %v2462 = vunpack.c.l.b16 %v1936
    %v2463 = vunpack.c.h.b16 %v1936
    %v2464 = vunpack.c.l.b16 %v1937
    %v2465 = vunpack.c.h.b16 %v1937
    %v2466 = vunpack.c.l.b16 %v1938
    %v2467 = vunpack.c.h.b16 %v1938
    %v2468 = vunpack.c.l.b16 %v1939
    %v2469 = vunpack.c.h.b16 %v1939
    %v2470 = vunpack.c.l.b16 %v1940
    %v2471 = vunpack.c.h.b16 %v1940
    %v2472 = vunpack.c.l.b16 %v1941
    %v2473 = vunpack.c.h.b16 %v1941
    %v2474 = vunpack.c.l.b16 %v1942
    %v2475 = vunpack.c.h.b16 %v1942
    %v2476 = vunpack.c.l.b16 %v1943
    %v2477 = vunpack.c.h.b16 %v1943
    %v2478 = vunpack.c.l.b16 %v1944
    %v2479 = vunpack.c.h.b16 %v1944
    %v2480 = vunpack.c.l.b16 %v1945
    %v2481 = vunpack.c.h.b16 %v1945
    %v2482 = vunpack.c.l.b16 %v1946
    %v2483 = vunpack.c.h.b16 %v1946
    %v2484 = vunpack.c.l.b16 %v1947
    %v2485 = vunpack.c.h.b16 %v1947
    %v2486 = vunpack.c.l.b16 %v1948
    %v2487 = vunpack.c.h.b16 %v1948
    %v2488 = vunpack.c.l.b16 %v1949
    %v2489 = vunpack.c.h.b16 %v1949
    %v2490 = vunpack.c.l.b16 %v1950
    %v2491 = vunpack.c.h.b16 %v1950
    %v2492 = vunpack.c.l.b16 %v1951
    %v2493 = vunpack.c.h.b16 %v1951
    %v2494 = vunpack.c.l.b16 %v1952
    %v2495 = vunpack.c.h.b16 %v1952
    %v2496 = vunpack.c.l.b16 %v1953
    %v2497 = vunpack.c.h.b16 %v1953
    %v2498 = vunpack.c.l.b16 %v1954
    %v2499 = vunpack.c.h.b16 %v1954
    %v2500 = vunpack.c.l.b16 %v1955
    %v2501 = vunpack.c.h.b16 %v1955
    %v2502 = vunpack.c.l.b16 %v1956
    %v2503 = vunpack.c.h.b16 %v1956
    %v2504 = vunpack.c.l.b16 %v1957
    %v2505 = vunpack.c.h.b16 %v1957
    %v2506 = vunpack.c.l.b16 %v1958
    %v2507 = vunpack.c.h.b16 %v1958
    %v2508 = vunpack.c.l.b16 %v1959
    %v2509 = vunpack.c.h.b16 %v1959
    %v2510 = vunpack.c.l.b16 %v1960
    %v2511 = vunpack.c.h.b16 %v1960
    %v2512 = vunpack.c.l.b16 %v1961
    %v2513 = vunpack.c.h.b16 %v1961
    %v2514 = vunpack.c.l.b16 %v1962
    %v2515 = vunpack.c.h.b16 %v1962
    %v2516 = vunpack.c.l.b16 %v1963
    %v2517 = vunpack.c.h.b16 %v1963
    %v2518 = vunpack.c.l.b16 %v1964
    %v2519 = vunpack.c.h.b16 %v1964
    %v2520 = vunpack.c.l.b16 %v1965
    %v2521 = vunpack.c.h.b16 %v1965
    %v2522 = vunpack.c.l.b16 %v1966
    %v2523 = vunpack.c.h.b16 %v1966
    %v2524 = vunpack.c.l.b16 %v1967
    %v2525 = vunpack.c.h.b16 %v1967
    %v2526 = vunpack.c.l.b16 %v1968
    %v2527 = vunpack.c.h.b16 %v1968
    %v2528 = vunpack.c.l.b16 %v1969
    %v2529 = vunpack.c.h.b16 %v1969
    %v2530 = vunpack.c.l.b16 %v1970
    %v2531 = vunpack.c.h.b16 %v1970
    %v2532 = vunpack.c.l.b16 %v1971
    %v2533 = vunpack.c.h.b16 %v1971
    %v2534 = vunpack.c.l.b16 %v1972
    %v2535 = vunpack.c.h.b16 %v1972
    %v2536 = vunpack.c.l.b16 %v1973
    %v2537 = vunpack.c.h.b16 %v1973
    %v2538 = vunpack.c.l.b16 %v1974
    %v2539 = vunpack.c.h.b16 %v1974
    %v2540 = vunpack.c.l.b16 %v1975
    %v2541 = vunpack.c.h.b16 %v1975
    %v2542 = vunpack.c.l.b16 %v1976
    %v2543 = vunpack.c.h.b16 %v1976
    %v2544 = vunpack.c.l.b16 %v1977
    %v2545 = vunpack.c.h.b16 %v1977
    %v2546 = vunpack.c.l.b16 %v1978
    %v2547 = vunpack.c.h.b16 %v1978
    %v2548 = vunpack.c.l.b16 %v1979
    %v2549 = vunpack.c.h.b16 %v1979
    %v2550 = vunpack.c.l.b16 %v1980
    %v2551 = vunpack.c.h.b16 %v1980
    %v2552 = vunpack.c.l.b16 %v1981
    %v2553 = vunpack.c.h.b16 %v1981
    %v2554 = vunpack.c.l.b16 %v1982
    %v2555 = vunpack.c.h.b16 %v1982
    %v2556 = vunpack.c.l.b16 %v1983
    %v2557 = vunpack.c.h.b16 %v1983
    %v2558 = vunpack.c.l.b16 %v1984
    %v2559 = vunpack.c.h.b16 %v1984
    %v2560 = vunpack.c.l.b16 %v1985
    %v2561 = vunpack.c.h.b16 %v1985
    %v2562 = vpack.c.b16 %v2184, %v2178
    %v2563 = vpack.c.b16 %v2185, %v2179
    %v2564 = vpack.c.b16 %v2186, %v2180
    %v2565 = vpack.c.b16 %v2187, %v2181
    %v2566 = vpack.c.b16 %v2188, %v2182
    %v2567 = vpack.c.b16 %v2189, %v2183
    %v2568 = vpack.c.b16 %v2196, %v2190
    %v2569 = vpack.c.b16 %v2197, %v2191
    %v2570 = vpack.c.b16 %v2198, %v2192
    %v2571 = vpack.c.b16 %v2199, %v2193
    %v2572 = vpack.c.b16 %v2200, %v2194
    %v2573 = vpack.c.b16 %v2201, %v2195
    %v2574 = vpack.c.b16 %v2208, %v2202
    %v2575 = vpack.c.b16 %v2209, %v2203
    %v2576 = vpack.c.b16 %v2210, %v2204
    %v2577 = vpack.c.b16 %v2211, %v2205
    %v2578 = vpack.c.b16 %v2212, %v2206
    %v2579 = vpack.c.b16 %v2213, %v2207
    %v2580 = vpack.c.b16 %v2220, %v2214
    %v2581 = vpack.c.b16 %v2221, %v2215
    %v2582 = vpack.c.b16 %v2222, %v2216
    %v2583 = vpack.c.b16 %v2223, %v2217
    %v2584 = vpack.c.b16 %v2224, %v2218
    %v2585 = vpack.c.b16 %v2225, %v2219
    %v2586 = vpack.c.b16 %v2232, %v2226
    %v2587 = vpack.c.b16 %v2233, %v2227
    %v2588 = vpack.c.b16 %v2234, %v2228
    %v2589 = vpack.c.b16 %v2235, %v2229
    %v2590 = vpack.c.b16 %v2236, %v2230
    %v2591 = vpack.c.b16 %v2237, %v2231
    %v2592 = vpack.c.b16 %v2244, %v2238
    %v2593 = vpack.c.b16 %v2245, %v2239
    %v2594 = vpack.c.b16 %v2246, %v2240
    %v2595 = vpack.c.b16 %v2247, %v2241
    %v2596 = vpack.c.b16 %v2248, %v2242
    %v2597 = vpack.c.b16 %v2249, %v2243
    %v2598 = vpack.c.b16 %v2256, %v2250
    %v2599 = vpack.c.b16 %v2257, %v2251
    %v2600 = vpack.c.b16 %v2258, %v2252
    %v2601 = vpack.c.b16 %v2259, %v2253
    %v2602 = vpack.c.b16 %v2260, %v2254
    %v2603 = vpack.c.b16 %v2261, %v2255
    %v2604 = vpack.c.b16 %v2268, %v2262
    %v2605 = vpack.c.b16 %v2269, %v2263
    %v2606 = vpack.c.b16 %v2270, %v2264
    %v2607 = vpack.c.b16 %v2271, %v2265
    %v2608 = vpack.c.b16 %v2272, %v2266
    %v2609 = vpack.c.b16 %v2273, %v2267
    %v2610 = vpack.c.b16 %v2280, %v2274
    %v2611 = vpack.c.b16 %v2281, %v2275
    %v2612 = vpack.c.b16 %v2282, %v2276
    %v2613 = vpack.c.b16 %v2283, %v2277
    %v2614 = vpack.c.b16 %v2284, %v2278
    %v2615 = vpack.c.b16 %v2285, %v2279
    %v2616 = vpack.c.b16 %v2292, %v2286
    %v2617 = vpack.c.b16 %v2293, %v2287
    %v2618 = vpack.c.b16 %v2294, %v2288
    %v2619 = vpack.c.b16 %v2295, %v2289
    %v2620 = vpack.c.b16 %v2296, %v2290
    %v2621 = vpack.c.b16 %v2297, %v2291
    %v2622 = vpack.c.b16 %v2304, %v2298
    %v2623 = vpack.c.b16 %v2305, %v2299
    %v2624 = vpack.c.b16 %v2306, %v2300
    %v2625 = vpack.c.b16 %v2307, %v2301
    %v2626 = vpack.c.b16 %v2308, %v2302
    %v2627 = vpack.c.b16 %v2309, %v2303
    %v2628 = vpack.c.b16 %v2316, %v2310
    %v2629 = vpack.c.b16 %v2317, %v2311
    %v2630 = vpack.c.b16 %v2318, %v2312
    %v2631 = vpack.c.b16 %v2319, %v2313
    %v2632 = vpack.c.b16 %v2320, %v2314
    %v2633 = vpack.c.b16 %v2321, %v2315
    %v2634 = vpack.c.b16 %v2328, %v2322
    %v2635 = vpack.c.b16 %v2329, %v2323
    %v2636 = vpack.c.b16 %v2330, %v2324
    %v2637 = vpack.c.b16 %v2331, %v2325
    %v2638 = vpack.c.b16 %v2332, %v2326
    %v2639 = vpack.c.b16 %v2333, %v2327
    %v2640 = vpack.c.b16 %v2340, %v2334
    %v2641 = vpack.c.b16 %v2341, %v2335
    %v2642 = vpack.c.b16 %v2342, %v2336
    %v2643 = vpack.c.b16 %v2343, %v2337
    %v2644 = vpack.c.b16 %v2344, %v2338
    %v2645 = vpack.c.b16 %v2345, %v2339
    %v2646 = vpack.c.b16 %v2352, %v2346
    %v2647 = vpack.c.b16 %v2353, %v2347
    %v2648 = vpack.c.b16 %v2354, %v2348
    %v2649 = vpack.c.b16 %v2355, %v2349
    %v2650 = vpack.c.b16 %v2356, %v2350
    %v2651 = vpack.c.b16 %v2357, %v2351
    %v2652 = vpack.c.b16 %v2364, %v2358
    %v2653 = vpack.c.b16 %v2365, %v2359
    %v2654 = vpack.c.b16 %v2366, %v2360
    %v2655 = vpack.c.b16 %v2367, %v2361
    %v2656 = vpack.c.b16 %v2368, %v2362
    %v2657 = vpack.c.b16 %v2369, %v2363
    %v2658 = vpack.c.b16 %v2376, %v2370
    %v2659 = vpack.c.b16 %v2377, %v2371
    %v2660 = vpack.c.b16 %v2378, %v2372
    %v2661 = vpack.c.b16 %v2379, %v2373
    %v2662 = vpack.c.b16 %v2380, %v2374
    %v2663 = vpack.c.b16 %v2381, %v2375
    %v2664 = vpack.c.b16 %v2388, %v2382
    %v2665 = vpack.c.b16 %v2389, %v2383
    %v2666 = vpack.c.b16 %v2390, %v2384
    %v2667 = vpack.c.b16 %v2391, %v2385
    %v2668 = vpack.c.b16 %v2392, %v2386
    %v2669 = vpack.c.b16 %v2393, %v2387
    %v2670 = vpack.c.b16 %v2400, %v2394
    %v2671 = vpack.c.b16 %v2401, %v2395
    %v2672 = vpack.c.b16 %v2402, %v2396
    %v2673 = vpack.c.b16 %v2403, %v2397
    %v2674 = vpack.c.b16 %v2404, %v2398
    %v2675 = vpack.c.b16 %v2405, %v2399
    %v2676 = vpack.c.b16 %v2412, %v2406
    %v2677 = vpack.c.b16 %v2413, %v2407
    %v2678 = vpack.c.b16 %v2414, %v2408
    %v2679 = vpack.c.b16 %v2415, %v2409
    %v2680 = vpack.c.b16 %v2416, %v2410
    %v2681 = vpack.c.b16 %v2417, %v2411
    %v2682 = vpack.c.b16 %v2424, %v2418
    %v2683 = vpack.c.b16 %v2425, %v2419
    %v2684 = vpack.c.b16 %v2426, %v2420
    %v2685 = vpack.c.b16 %v2427, %v2421
    %v2686 = vpack.c.b16 %v2428, %v2422
    %v2687 = vpack.c.b16 %v2429, %v2423
    %v2688 = vpack.c.b16 %v2436, %v2430
    %v2689 = vpack.c.b16 %v2437, %v2431
    %v2690 = vpack.c.b16 %v2438, %v2432
    %v2691 = vpack.c.b16 %v2439, %v2433
    %v2692 = vpack.c.b16 %v2440, %v2434
    %v2693 = vpack.c.b16 %v2441, %v2435
    %v2694 = vpack.c.b16 %v2448, %v2442
    %v2695 = vpack.c.b16 %v2449, %v2443
    %v2696 = vpack.c.b16 %v2450, %v2444
    %v2697 = vpack.c.b16 %v2451, %v2445
    %v2698 = vpack.c.b16 %v2452, %v2446
    %v2699 = vpack.c.b16 %v2453, %v2447
    %v2700 = vpack.c.b16 %v2460, %v2454
    %v2701 = vpack.c.b16 %v2461, %v2455
    %v2702 = vpack.c.b16 %v2462, %v2456
    %v2703 = vpack.c.b16 %v2463, %v2457
    %v2704 = vpack.c.b16 %v2464, %v2458
    %v2705 = vpack.c.b16 %v2465, %v2459
    %v2706 = vpack.c.b16 %v2472, %v2466
    %v2707 = vpack.c.b16 %v2473, %v2467
    %v2708 = vpack.c.b16 %v2474, %v2468
    %v2709 = vpack.c.b16 %v2475, %v2469
    %v2710 = vpack.c.b16 %v2476, %v2470
    %v2711 = vpack.c.b16 %v2477, %v2471
    %v2712 = vpack.c.b16 %v2484, %v2478
    %v2713 = vpack.c.b16 %v2485, %v2479
    %v2714 = vpack.c.b16 %v2486, %v2480
    %v2715 = vpack.c.b16 %v2487, %v2481
    %v2716 = vpack.c.b16 %v2488, %v2482
    %v2717 = vpack.c.b16 %v2489, %v2483
    %v2718 = vpack.c.b16 %v2496, %v2490
    %v2719 = vpack.c.b16 %v2497, %v2491
    %v2720 = vpack.c.b16 %v2498, %v2492
    %v2721 = vpack.c.b16 %v2499, %v2493
    %v2722 = vpack.c.b16 %v2500, %v2494
    %v2723 = vpack.c.b16 %v2501, %v2495
    %v2724 = vpack.c.b16 %v2508, %v2502
    %v2725 = vpack.c.b16 %v2509, %v2503
    %v2726 = vpack.c.b16 %v2510, %v2504
    %v2727 = vpack.c.b16 %v2511, %v2505
    %v2728 = vpack.c.b16 %v2512, %v2506
    %v2729 = vpack.c.b16 %v2513, %v2507
    %v2730 = vpack.c.b16 %v2520, %v2514
    %v2731 = vpack.c.b16 %v2521, %v2515
    %v2732 = vpack.c.b16 %v2522, %v2516
    %v2733 = vpack.c.b16 %v2523, %v2517
    %v2734 = vpack.c.b16 %v2524, %v2518
    %v2735 = vpack.c.b16 %v2525, %v2519
    %v2736 = vpack.c.b16 %v2532, %v2526
    %v2737 = vpack.c.b16 %v2533, %v2527
    %v2738 = vpack.c.b16 %v2534, %v2528
    %v2739 = vpack.c.b16 %v2535, %v2529
    %v2740 = vpack.c.b16 %v2536, %v2530
    %v2741 = vpack.c.b16 %v2537, %v2531
    %v2742 = vpack.c.b16 %v2544, %v2538
    %v2743 = vpack.c.b16 %v2545, %v2539
    %v2744 = vpack.c.b16 %v2546, %v2540
    %v2745 = vpack.c.b16 %v2547, %v2541
    %v2746 = vpack.c.b16 %v2548, %v2542
    %v2747 = vpack.c.b16 %v2549, %v2543
    %v2748 = vpack.c.b16 %v2556, %v2550
    %v2749 = vpack.c.b16 %v2557, %v2551
    %v2750 = vpack.c.b16 %v2558, %v2552
    %v2751 = vpack.c.b16 %v2559, %v2553
    %v2752 = vpack.c.b16 %v2560, %v2554
    %v2753 = vpack.c.b16 %v2561, %v2555
    %2946 = vmatpush.bf16.msra.mxu0 %v2604
    %2947 = vmatpush.bf16.msra.mxu0 %v2598
    %2948 = vmatpush.bf16.msra.mxu0 %v2592
    %2949 = vmatpush.bf16.msra.mxu0 %v2586
    %2950 = vmatpush.bf16.msra.mxu0 %v2580
    %2951 = vmatpush.bf16.msra.mxu0 %v2574
    %2952 = vmatpush.bf16.msra.mxu0 %v2568
    %2953 = vmatpush.bf16.msra.mxu0 %v2562
    %2954 = vmatmul.bf16.gmra.mxu0 %v1790
    %v2955 = vpop.f32.mrf.mxu0
    %v2956 = vadd.f32 0.0, %v2955
    %v2957 = vpop.f32.mrf.mxu0
    %2958 = vdwg.mxu0
    %2959 = vmatpush.bf16.msra.mxu0 %v2652
    %2960 = vmatpush.bf16.msra.mxu0 %v2646
    %2961 = vmatpush.bf16.msra.mxu0 %v2640
    %2962 = vmatpush.bf16.msra.mxu0 %v2634
    %2963 = vmatpush.bf16.msra.mxu0 %v2628
    %2964 = vmatpush.bf16.msra.mxu0 %v2622
    %2965 = vmatpush.bf16.msra.mxu0 %v2616
    %2966 = vmatpush.bf16.msra.mxu0 %v2610
    %2967 = vmatmul.bf16.gmra.mxu0 %v1791
    %v2968 = vpop.f32.mrf.mxu0
    %v2969 = vadd.f32 %v2956, %v2968
    %v2970 = vpop.f32.mrf.mxu0
    %2971 = vdwg.mxu0
    %2972 = vmatpush.bf16.msra.mxu0 %v2700
    %2973 = vmatpush.bf16.msra.mxu0 %v2694
    %2974 = vmatpush.bf16.msra.mxu0 %v2688
    %2975 = vmatpush.bf16.msra.mxu0 %v2682
    %2976 = vmatpush.bf16.msra.mxu0 %v2676
    %2977 = vmatpush.bf16.msra.mxu0 %v2670
    %2978 = vmatpush.bf16.msra.mxu0 %v2664
    %2979 = vmatpush.bf16.msra.mxu0 %v2658
    %2980 = vmatmul.bf16.gmra.mxu0 %v1792
    %v2981 = vpop.f32.mrf.mxu0
    %v2982 = vadd.f32 %v2969, %v2981
    %v2983 = vpop.f32.mrf.mxu0
    %2984 = vdwg.mxu0
    %2985 = vmatpush.bf16.msra.mxu0 %v2748
    %2986 = vmatpush.bf16.msra.mxu0 %v2742
    %2987 = vmatpush.bf16.msra.mxu0 %v2736
    %2988 = vmatpush.bf16.msra.mxu0 %v2730
    %2989 = vmatpush.bf16.msra.mxu0 %v2724
    %2990 = vmatpush.bf16.msra.mxu0 %v2718
    %2991 = vmatpush.bf16.msra.mxu0 %v2712
    %2992 = vmatpush.bf16.msra.mxu0 %v2706
    %2993 = vmatmul.bf16.gmra.mxu0 %v1793
    %v2994 = vpop.f32.mrf.mxu0
    %v2995 = vadd.f32 %v2982, %v2994
    %v2996 = vpop.f32.mrf.mxu0
    %2997 = vdwg.mxu0
    %2998 = vmatpush.bf16.msra.mxu0 %v2605
    %2999 = vmatpush.bf16.msra.mxu0 %v2599
    %3000 = vmatpush.bf16.msra.mxu0 %v2593
    %3001 = vmatpush.bf16.msra.mxu0 %v2587
    %3002 = vmatpush.bf16.msra.mxu0 %v2581
    %3003 = vmatpush.bf16.msra.mxu0 %v2575
    %3004 = vmatpush.bf16.msra.mxu0 %v2569
    %3005 = vmatpush.bf16.msra.mxu0 %v2563
    %3006 = vmatmul.bf16.gmra.mxu0 %v1790
    %v3007 = vpop.f32.mrf.mxu0
    %v3008 = vadd.f32 0.0, %v3007
    %v3009 = vpop.f32.mrf.mxu0
    %3010 = vdwg.mxu0
    %3011 = vmatpush.bf16.msra.mxu0 %v2653
    %3012 = vmatpush.bf16.msra.mxu0 %v2647
    %3013 = vmatpush.bf16.msra.mxu0 %v2641
    %3014 = vmatpush.bf16.msra.mxu0 %v2635
    %3015 = vmatpush.bf16.msra.mxu0 %v2629
    %3016 = vmatpush.bf16.msra.mxu0 %v2623
    %3017 = vmatpush.bf16.msra.mxu0 %v2617
    %3018 = vmatpush.bf16.msra.mxu0 %v2611
    %3019 = vmatmul.bf16.gmra.mxu0 %v1791
    %v3020 = vpop.f32.mrf.mxu0
    %v3021 = vadd.f32 %v3008, %v3020
    %v3022 = vpop.f32.mrf.mxu0
    %3023 = vdwg.mxu0
    %3024 = vmatpush.bf16.msra.mxu0 %v2701
    %3025 = vmatpush.bf16.msra.mxu0 %v2695
    %3026 = vmatpush.bf16.msra.mxu0 %v2689
    %3027 = vmatpush.bf16.msra.mxu0 %v2683
    %3028 = vmatpush.bf16.msra.mxu0 %v2677
    %3029 = vmatpush.bf16.msra.mxu0 %v2671
    %3030 = vmatpush.bf16.msra.mxu0 %v2665
    %3031 = vmatpush.bf16.msra.mxu0 %v2659
    %3032 = vmatmul.bf16.gmra.mxu0 %v1792
    %v3033 = vpop.f32.mrf.mxu0
    %v3034 = vadd.f32 %v3021, %v3033
    %v3035 = vpop.f32.mrf.mxu0
    %3036 = vdwg.mxu0
    %3037 = vmatpush.bf16.msra.mxu0 %v2749
    %3038 = vmatpush.bf16.msra.mxu0 %v2743
    %3039 = vmatpush.bf16.msra.mxu0 %v2737
    %3040 = vmatpush.bf16.msra.mxu0 %v2731
    %3041 = vmatpush.bf16.msra.mxu0 %v2725
    %3042 = vmatpush.bf16.msra.mxu0 %v2719
    %3043 = vmatpush.bf16.msra.mxu0 %v2713
    %3044 = vmatpush.bf16.msra.mxu0 %v2707
    %3045 = vmatmul.bf16.gmra.mxu0 %v1793
    %v3046 = vpop.f32.mrf.mxu0
    %v3047 = vadd.f32 %v3034, %v3046
    %v3048 = vpop.f32.mrf.mxu0
    %3049 = vdwg.mxu0
    %3050 = vmatpush.bf16.msra.mxu0 %v2606
    %3051 = vmatpush.bf16.msra.mxu0 %v2600
    %3052 = vmatpush.bf16.msra.mxu0 %v2594
    %3053 = vmatpush.bf16.msra.mxu0 %v2588
    %3054 = vmatpush.bf16.msra.mxu0 %v2582
    %3055 = vmatpush.bf16.msra.mxu0 %v2576
    %3056 = vmatpush.bf16.msra.mxu0 %v2570
    %3057 = vmatpush.bf16.msra.mxu0 %v2564
    %3058 = vmatmul.bf16.gmra.mxu0 %v1790
    %v3059 = vpop.f32.mrf.mxu0
    %v3060 = vadd.f32 0.0, %v3059
    %v3061 = vpop.f32.mrf.mxu0
    %3062 = vdwg.mxu0
    %3063 = vmatpush.bf16.msra.mxu0 %v2654
    %3064 = vmatpush.bf16.msra.mxu0 %v2648
    %3065 = vmatpush.bf16.msra.mxu0 %v2642
    %3066 = vmatpush.bf16.msra.mxu0 %v2636
    %3067 = vmatpush.bf16.msra.mxu0 %v2630
    %3068 = vmatpush.bf16.msra.mxu0 %v2624
    %3069 = vmatpush.bf16.msra.mxu0 %v2618
    %3070 = vmatpush.bf16.msra.mxu0 %v2612
    %3071 = vmatmul.bf16.gmra.mxu0 %v1791
    %v3072 = vpop.f32.mrf.mxu0
    %v3073 = vadd.f32 %v3060, %v3072
    %v3074 = vpop.f32.mrf.mxu0
    %3075 = vdwg.mxu0
    %3076 = vmatpush.bf16.msra.mxu0 %v2702
    %3077 = vmatpush.bf16.msra.mxu0 %v2696
    %3078 = vmatpush.bf16.msra.mxu0 %v2690
    %3079 = vmatpush.bf16.msra.mxu0 %v2684
    %3080 = vmatpush.bf16.msra.mxu0 %v2678
    %3081 = vmatpush.bf16.msra.mxu0 %v2672
    %3082 = vmatpush.bf16.msra.mxu0 %v2666
    %3083 = vmatpush.bf16.msra.mxu0 %v2660
    %3084 = vmatmul.bf16.gmra.mxu0 %v1792
    %v3085 = vpop.f32.mrf.mxu0
    %v3086 = vadd.f32 %v3073, %v3085
    %v3087 = vpop.f32.mrf.mxu0
    %3088 = vdwg.mxu0
    %3089 = vmatpush.bf16.msra.mxu0 %v2750
    %3090 = vmatpush.bf16.msra.mxu0 %v2744
    %3091 = vmatpush.bf16.msra.mxu0 %v2738
    %3092 = vmatpush.bf16.msra.mxu0 %v2732
    %3093 = vmatpush.bf16.msra.mxu0 %v2726
    %3094 = vmatpush.bf16.msra.mxu0 %v2720
    %3095 = vmatpush.bf16.msra.mxu0 %v2714
    %3096 = vmatpush.bf16.msra.mxu0 %v2708
    %3097 = vmatmul.bf16.gmra.mxu0 %v1793
    %v3098 = vpop.f32.mrf.mxu0
    %v3099 = vadd.f32 %v3086, %v3098
    %v3100 = vpop.f32.mrf.mxu0
    %3101 = vdwg.mxu0
    %3102 = vmatpush.bf16.msra.mxu0 %v2607
    %3103 = vmatpush.bf16.msra.mxu0 %v2601
    %3104 = vmatpush.bf16.msra.mxu0 %v2595
    %3105 = vmatpush.bf16.msra.mxu0 %v2589
    %3106 = vmatpush.bf16.msra.mxu0 %v2583
    %3107 = vmatpush.bf16.msra.mxu0 %v2577
    %3108 = vmatpush.bf16.msra.mxu0 %v2571
    %3109 = vmatpush.bf16.msra.mxu0 %v2565
    %3110 = vmatmul.bf16.gmra.mxu0 %v1790
    %v3111 = vpop.f32.mrf.mxu0
    %v3112 = vadd.f32 0.0, %v3111
    %v3113 = vpop.f32.mrf.mxu0
    %3114 = vdwg.mxu0
    %3115 = vmatpush.bf16.msra.mxu0 %v2655
    %3116 = vmatpush.bf16.msra.mxu0 %v2649
    %3117 = vmatpush.bf16.msra.mxu0 %v2643
    %3118 = vmatpush.bf16.msra.mxu0 %v2637
    %3119 = vmatpush.bf16.msra.mxu0 %v2631
    %3120 = vmatpush.bf16.msra.mxu0 %v2625
    %3121 = vmatpush.bf16.msra.mxu0 %v2619
    %3122 = vmatpush.bf16.msra.mxu0 %v2613
    %3123 = vmatmul.bf16.gmra.mxu0 %v1791
    %v3124 = vpop.f32.mrf.mxu0
    %v3125 = vadd.f32 %v3112, %v3124
    %v3126 = vpop.f32.mrf.mxu0
    %3127 = vdwg.mxu0
    %3128 = vmatpush.bf16.msra.mxu0 %v2703
    %3129 = vmatpush.bf16.msra.mxu0 %v2697
    %3130 = vmatpush.bf16.msra.mxu0 %v2691
    %3131 = vmatpush.bf16.msra.mxu0 %v2685
    %3132 = vmatpush.bf16.msra.mxu0 %v2679
    %3133 = vmatpush.bf16.msra.mxu0 %v2673
    %3134 = vmatpush.bf16.msra.mxu0 %v2667
    %3135 = vmatpush.bf16.msra.mxu0 %v2661
    %3136 = vmatmul.bf16.gmra.mxu0 %v1792
    %v3137 = vpop.f32.mrf.mxu0
    %v3138 = vadd.f32 %v3125, %v3137
    %v3139 = vpop.f32.mrf.mxu0
    %3140 = vdwg.mxu0
    %3141 = vmatpush.bf16.msra.mxu0 %v2751
    %3142 = vmatpush.bf16.msra.mxu0 %v2745
    %3143 = vmatpush.bf16.msra.mxu0 %v2739
    %3144 = vmatpush.bf16.msra.mxu0 %v2733
    %3145 = vmatpush.bf16.msra.mxu0 %v2727
    %3146 = vmatpush.bf16.msra.mxu0 %v2721
    %3147 = vmatpush.bf16.msra.mxu0 %v2715
    %3148 = vmatpush.bf16.msra.mxu0 %v2709
    %3149 = vmatmul.bf16.gmra.mxu0 %v1793
    %v3150 = vpop.f32.mrf.mxu0
    %v3151 = vadd.f32 %v3138, %v3150
    %v3152 = vpop.f32.mrf.mxu0
    %3153 = vdwg.mxu0
    %3154 = vmatpush.bf16.msra.mxu0 %v2608
    %3155 = vmatpush.bf16.msra.mxu0 %v2602
    %3156 = vmatpush.bf16.msra.mxu0 %v2596
    %3157 = vmatpush.bf16.msra.mxu0 %v2590
    %3158 = vmatpush.bf16.msra.mxu0 %v2584
    %3159 = vmatpush.bf16.msra.mxu0 %v2578
    %3160 = vmatpush.bf16.msra.mxu0 %v2572
    %3161 = vmatpush.bf16.msra.mxu0 %v2566
    %3162 = vmatmul.bf16.gmra.mxu0 %v1790
    %v3163 = vpop.f32.mrf.mxu0
    %v3164 = vadd.f32 0.0, %v3163
    %v3165 = vpop.f32.mrf.mxu0
    %3166 = vdwg.mxu0
    %3167 = vmatpush.bf16.msra.mxu0 %v2656
    %3168 = vmatpush.bf16.msra.mxu0 %v2650
    %3169 = vmatpush.bf16.msra.mxu0 %v2644
    %3170 = vmatpush.bf16.msra.mxu0 %v2638
    %3171 = vmatpush.bf16.msra.mxu0 %v2632
    %3172 = vmatpush.bf16.msra.mxu0 %v2626
    %3173 = vmatpush.bf16.msra.mxu0 %v2620
    %3174 = vmatpush.bf16.msra.mxu0 %v2614
    %3175 = vmatmul.bf16.gmra.mxu0 %v1791
    %v3176 = vpop.f32.mrf.mxu0
    %v3177 = vadd.f32 %v3164, %v3176
    %v3178 = vpop.f32.mrf.mxu0
    %3179 = vdwg.mxu0
    %3180 = vmatpush.bf16.msra.mxu0 %v2704
    %3181 = vmatpush.bf16.msra.mxu0 %v2698
    %3182 = vmatpush.bf16.msra.mxu0 %v2692
    %3183 = vmatpush.bf16.msra.mxu0 %v2686
    %3184 = vmatpush.bf16.msra.mxu0 %v2680
    %3185 = vmatpush.bf16.msra.mxu0 %v2674
    %3186 = vmatpush.bf16.msra.mxu0 %v2668
    %3187 = vmatpush.bf16.msra.mxu0 %v2662
    %3188 = vmatmul.bf16.gmra.mxu0 %v1792
    %v3189 = vpop.f32.mrf.mxu0
    %v3190 = vadd.f32 %v3177, %v3189
    %v3191 = vpop.f32.mrf.mxu0
    %3192 = vdwg.mxu0
    %3193 = vmatpush.bf16.msra.mxu0 %v2752
    %3194 = vmatpush.bf16.msra.mxu0 %v2746
    %3195 = vmatpush.bf16.msra.mxu0 %v2740
    %3196 = vmatpush.bf16.msra.mxu0 %v2734
    %3197 = vmatpush.bf16.msra.mxu0 %v2728
    %3198 = vmatpush.bf16.msra.mxu0 %v2722
    %3199 = vmatpush.bf16.msra.mxu0 %v2716
    %3200 = vmatpush.bf16.msra.mxu0 %v2710
    %3201 = vmatmul.bf16.gmra.mxu0 %v1793
    %v3202 = vpop.f32.mrf.mxu0
    %v3203 = vadd.f32 %v3190, %v3202
    %v3204 = vpop.f32.mrf.mxu0
    %3205 = vdwg.mxu0
    %3206 = vmatpush.bf16.msra.mxu0 %v2609
    %3207 = vmatpush.bf16.msra.mxu0 %v2603
    %3208 = vmatpush.bf16.msra.mxu0 %v2597
    %3209 = vmatpush.bf16.msra.mxu0 %v2591
    %3210 = vmatpush.bf16.msra.mxu0 %v2585
    %3211 = vmatpush.bf16.msra.mxu0 %v2579
    %3212 = vmatpush.bf16.msra.mxu0 %v2573
    %3213 = vmatpush.bf16.msra.mxu0 %v2567
    %3214 = vmatmul.bf16.gmra.mxu0 %v1790
    %v3215 = vpop.f32.mrf.mxu0
    %v3216 = vadd.f32 0.0, %v3215
    %v3217 = vpop.f32.mrf.mxu0
    %3218 = vdwg.mxu0
    %3219 = vmatpush.bf16.msra.mxu0 %v2657
    %3220 = vmatpush.bf16.msra.mxu0 %v2651
    %3221 = vmatpush.bf16.msra.mxu0 %v2645
    %3222 = vmatpush.bf16.msra.mxu0 %v2639
    %3223 = vmatpush.bf16.msra.mxu0 %v2633
    %3224 = vmatpush.bf16.msra.mxu0 %v2627
    %3225 = vmatpush.bf16.msra.mxu0 %v2621
    %3226 = vmatpush.bf16.msra.mxu0 %v2615
    %3227 = vmatmul.bf16.gmra.mxu0 %v1791
    %v3228 = vpop.f32.mrf.mxu0
    %v3229 = vadd.f32 %v3216, %v3228
    %v3230 = vpop.f32.mrf.mxu0
    %3231 = vdwg.mxu0
    %3232 = vmatpush.bf16.msra.mxu0 %v2705
    %3233 = vmatpush.bf16.msra.mxu0 %v2699
    %3234 = vmatpush.bf16.msra.mxu0 %v2693
    %3235 = vmatpush.bf16.msra.mxu0 %v2687
    %3236 = vmatpush.bf16.msra.mxu0 %v2681
    %3237 = vmatpush.bf16.msra.mxu0 %v2675
    %3238 = vmatpush.bf16.msra.mxu0 %v2669
    %3239 = vmatpush.bf16.msra.mxu0 %v2663
    %3240 = vmatmul.bf16.gmra.mxu0 %v1792
    %v3241 = vpop.f32.mrf.mxu0
    %v3242 = vadd.f32 %v3229, %v3241
    %v3243 = vpop.f32.mrf.mxu0
    %3244 = vdwg.mxu0
    %3245 = vmatpush.bf16.msra.mxu0 %v2753
    %3246 = vmatpush.bf16.msra.mxu0 %v2747
    %3247 = vmatpush.bf16.msra.mxu0 %v2741
    %3248 = vmatpush.bf16.msra.mxu0 %v2735
    %3249 = vmatpush.bf16.msra.mxu0 %v2729
    %3250 = vmatpush.bf16.msra.mxu0 %v2723
    %3251 = vmatpush.bf16.msra.mxu0 %v2717
    %3252 = vmatpush.bf16.msra.mxu0 %v2711
    %3253 = vmatmul.bf16.gmra.mxu0 %v1793
    %v3254 = vpop.f32.mrf.mxu0
    %v3255 = vadd.f32 %v3242, %v3254
    %v3256 = vpop.f32.mrf.mxu0
    %3257 = vdwg.mxu0
    %v3258 = vld [vmem:[#allocation7] sm:$0xf]
    %v3260 = vperm.slane %v3258, 0
    %v3261 = vperm.slane %v3258, 1
    %v3262 = vperm.slane %v3258, 2
    %v3263 = vperm.slane %v3258, 3
    %v3268 = vmul.f32 %v3260, %v1553
    %v3269 = vmul.f32 %v3261, %v1631
    %v3270 = vmul.f32 %v3262, %v1709
    %v3271 = vmul.f32 %v3263, %v1787
    %vm3272 = vcmask 1041408
    %v3273 = vsel %vm3272, %v3268, 0.0
    %v3274 = vsel %vm3272, %v3269, 0.0
    %v3275 = vadd.f32 %v3273, %v3274
    %v3276 = vsel %vm3272, %v3270, 0.0
    %v3277 = vadd.f32 %v3275, %v3276
    %v3278 = vsel %vm3272, %v3271, 0.0
    %v3279 = vadd.f32 %v3277, %v3278
    %3280 = vadd.xlane.f32.xlu0 %v3279
    %v3281 = vpop.xlane.xlu0 %3280
    %v3282 = vpack.c.bf16 %v3047, %v2995
    %v3283 = vpack.c.bf16 %v3151, %v3099
    %v3284 = vpack.c.bf16 %v3255, %v3203
    %v3288 = vrot.slane %v3282, 3
    %v3289 = vrot.slane %v3283, 6
    %v3290 = vrot.slane %v3283, 1
    %v3291 = vrot.slane %v3284, 4
    %v3292 = vrot.slane %v3284, 7
    %vm3293 = vcmask 1040384
    %v3296 = vsel %vm3293, %v3282, %v3288
    %v3298 = vsel %vm3272, %v3296, %v3289
    %vm3299 = vcmask 1043459
    %v3302 = vsel %vm3299, %v3290, %v3291
    %vm3303 = vcmask 1044483
    %v3305 = vsel %vm3303, %v3302, %v3292
    %vm3306 = vcmask 1042432
    %v3307 = vsel %vm3306, %v3298, %v3305
    %v3309 = vunpack.i.l.s16 %v3307
    %v3310 = vunpack.i.h.s16 %v3307
    %v3311 = vpack.i.b16 %v3309, %v3309
    %v3312 = vpack.i.b16 %v3310, %v3310
    %v3313 = vperm.slane %v3311, 0
    %v3314 = vperm.slane %v3311, 1
    %v3315 = vperm.slane %v3311, 2
    %v3316 = vperm.slane %v3311, 3
    %v3317 = vperm.slane %v3311, 4
    %v3318 = vperm.slane %v3311, 5
    %v3319 = vperm.slane %v3312, 0
    %v3320 = vperm.slane %v3312, 1
    %v3321 = vperm.slane %v3312, 2
    %v3322 = vperm.slane %v3312, 3
    %v3323 = vperm.slane %v3312, 4
    %v3324 = vperm.slane %v3312, 5
    %v3326 = vpack.i.b16 %v3313, %v3313
    %v3328 = vperm.slane %v3326, 0
    %v3330 = vpack.i.b16 %v3314, %v3314
    %v3332 = vperm.slane %v3330, 0
    %v3334 = vpack.i.b16 %v3315, %v3315
    %v3336 = vperm.slane %v3334, 0
    %v3338 = vpack.i.b16 %v3316, %v3316
    %v3340 = vperm.slane %v3338, 0
    %v3342 = vpack.i.b16 %v3317, %v3317
    %v3344 = vperm.slane %v3342, 0
    %v3346 = vpack.i.b16 %v3318, %v3318
    %v3348 = vperm.slane %v3346, 0
    %v3350 = vpack.i.b16 %v3319, %v3319
    %v3352 = vperm.slane %v3350, 0
    %v3354 = vpack.i.b16 %v3320, %v3320
    %v3356 = vperm.slane %v3354, 0
    %v3358 = vpack.i.b16 %v3321, %v3321
    %v3360 = vperm.slane %v3358, 0
    %v3362 = vpack.i.b16 %v3322, %v3322
    %v3364 = vperm.slane %v3362, 0
    %v3366 = vpack.i.b16 %v3323, %v3323
    %v3368 = vperm.slane %v3366, 0
    %v3370 = vpack.i.b16 %v3324, %v3324
    %v3372 = vperm.slane %v3370, 0
    %v3373 = vunpack.c.l.bf16 %v85
    %v3374 = vunpack.c.h.bf16 %v85
    %v3375 = vunpack.c.l.bf16 %v86
    %v3376 = vunpack.c.h.bf16 %v86
    %v3377 = vunpack.c.l.bf16 %v87
    %v3378 = vunpack.c.h.bf16 %v87
    %v3379 = vunpack.c.l.bf16 %v88
    %v3380 = vunpack.c.h.bf16 %v88
    %v3381 = vunpack.c.l.bf16 %v89
    %v3382 = vunpack.c.h.bf16 %v89
    %v3383 = vunpack.c.l.bf16 %v90
    %v3384 = vunpack.c.h.bf16 %v90
    %v3385 = vunpack.c.l.bf16 %v3328
    %v3386 = vunpack.c.l.bf16 %v3332
    %v3387 = vunpack.c.l.bf16 %v3336
    %v3388 = vunpack.c.l.bf16 %v3340
    %v3389 = vunpack.c.l.bf16 %v3344
    %v3390 = vunpack.c.l.bf16 %v3348
    %v3391 = vunpack.c.l.bf16 %v3352
    %v3392 = vunpack.c.l.bf16 %v3356
    %v3393 = vunpack.c.l.bf16 %v3360
    %v3394 = vunpack.c.l.bf16 %v3364
    %v3395 = vunpack.c.l.bf16 %v3368
    %v3396 = vunpack.c.l.bf16 %v3372
    %v3397 = vmul.f32 %v3373, %v3385
    %v3398 = vmul.f32 %v3374, %v3386
    %v3399 = vmul.f32 %v3375, %v3387
    %v3400 = vmul.f32 %v3376, %v3388
    %v3401 = vmul.f32 %v3377, %v3389
    %v3402 = vmul.f32 %v3378, %v3390
    %v3403 = vmul.f32 %v3379, %v3391
    %v3404 = vmul.f32 %v3380, %v3392
    %v3405 = vmul.f32 %v3381, %v3393
    %v3406 = vmul.f32 %v3382, %v3394
    %v3407 = vmul.f32 %v3383, %v3395
    %v3408 = vmul.f32 %v3384, %v3396
    %v3409 = vpack.c.bf16 %v3397, %v3397
    %v3410 = vpack.c.bf16 %v3398, %v3398
    %v3411 = vpack.c.bf16 %v3399, %v3399
    %v3412 = vpack.c.bf16 %v3400, %v3400
    %v3413 = vpack.c.bf16 %v3401, %v3401
    %v3414 = vpack.c.bf16 %v3402, %v3402
    %v3415 = vpack.c.bf16 %v3403, %v3403
    %v3416 = vpack.c.bf16 %v3404, %v3404
    %v3417 = vpack.c.bf16 %v3405, %v3405
    %v3418 = vpack.c.bf16 %v3406, %v3406
    %v3419 = vpack.c.bf16 %v3407, %v3407
    %v3420 = vpack.c.bf16 %v3408, %v3408
    %v3421 = vunpack.c.l.bf16 %v3409
    %v3422 = vunpack.c.l.bf16 %v3410
    %v3423 = vunpack.c.l.bf16 %v3411
    %v3424 = vunpack.c.l.bf16 %v3412
    %v3425 = vunpack.c.l.bf16 %v3413
    %v3426 = vunpack.c.l.bf16 %v3414
    %v3427 = vunpack.c.l.bf16 %v3415
    %v3428 = vunpack.c.l.bf16 %v3416
    %v3429 = vunpack.c.l.bf16 %v3417
    %v3430 = vunpack.c.l.bf16 %v3418
    %v3431 = vunpack.c.l.bf16 %v3419
    %v3432 = vunpack.c.l.bf16 %v3420
    %v3433 = vadd.f32 %v3421, %v3422
    %v3434 = vadd.f32 %v3433, %v3423
    %v3435 = vadd.f32 %v3434, %v3424
    %v3436 = vadd.f32 %v3435, %v3425
    %v3437 = vadd.f32 %v3436, %v3426
    %3438 = vadd.xlane.f32.xlu0 %v3437
    %v3439 = vpop.xlane.xlu0 %3438
    %v3440 = vadd.f32 %v3427, %v3428
    %v3441 = vadd.f32 %v3440, %v3429
    %v3442 = vadd.f32 %v3441, %v3430
    %v3443 = vadd.f32 %v3442, %v3431
    %v3444 = vadd.f32 %v3443, %v3432
    %3445 = vadd.xlane.f32.xlu0 %v3444
    %v3446 = vpop.xlane.xlu0 %3445
    %v3448 = vperm.slane %v3281, 0
    %v3449 = vperm.slane %v3281, 1
    %v3452 = vadd.f32 %v3439, %v3448
    %v3453 = vadd.f32 %v3446, %v3449
    %v3454 = vsub.f32 %v3452, %v3452
    %v3455 = vsub.f32 %v3453, %v3453
    %v3456 = vmul.f32 %v3454, 1.442695
    %v3457 = vpow.pop %v3456
    %v3458 = vmul.f32 %v3455, 1.442695
    %v3459 = vpow.pop %v3458
    %v3460 = vrcp.pop %v3457
    %v3461 = vmul.f32 %v3457, %v3460
    %v3462 = vsub.f32 1.0, %v3461
    %v3463 = vmul.f32 %v3460, %v3462
    %v3464 = vadd.f32 %v3460, %v3463
    %vm3465 = vweird.f32 %v3457
    %vm3466 = vweird.f32 %v3460
    %vm3467 = vmor %vm3465, %vm3466
    %v3468 = vsel %vm3467, %v3460, %v3464
    %v3469 = vand.u32 2147483647, %v3457
    %vm3470 = vcmp.eq.f32.partialorder %v3469, 8.507059e+37
    %v3471 = vand.u32 %v3457, 2147483648
    %v3472 = vor.u32 1.1754944e-38, %v3471
    %v3473 = vsel %vm3470, %v3472, %v3468
    %v3474 = vmul.f32 %v3457, %v3473
    %v3475 = vrcp.pop %v3459
    %v3476 = vmul.f32 %v3459, %v3475
    %v3477 = vsub.f32 1.0, %v3476
    %v3478 = vmul.f32 %v3475, %v3477
    %v3479 = vadd.f32 %v3475, %v3478
    %vm3480 = vweird.f32 %v3459
    %vm3481 = vweird.f32 %v3475
    %vm3482 = vmor %vm3480, %vm3481
    %v3483 = vsel %vm3482, %v3475, %v3479
    %v3484 = vand.u32 2147483647, %v3459
    %vm3485 = vcmp.eq.f32.partialorder %v3484, 8.507059e+37
    %v3486 = vand.u32 %v3459, 2147483648
    %v3487 = vor.u32 1.1754944e-38, %v3486
    %v3488 = vsel %vm3485, %v3487, %v3483
    %v3489 = vmul.f32 %v3459, %v3488
    %vm3490 = vcmask 7168
    %3491 = vst.msk [vmem:[%s6] sm:$0xff] %vm3490, %v3474
    %3492 = vst.msk [vmem:[%s6 + $0x8] sm:$0xff] %vm3490, %v3489
    // Predicated region
    $region42: #{tpu_custom_call.1} parent=1 // pred_check
      _
    $region43: #{tpu_custom_call.1} parent=1 // pred_check_branch
      %3494 = sbr.rel (0) target = $region45
    $region44: #{tpu_custom_call.1} parent=1 // pred_region
      _
    $region45: #{tpu_custom_call.1} parent=1 // pred_fallthru
      _
    // Predicated region
    $region46: #{tpu_custom_call.1} parent=1 // pred_check
      _
    $region47: #{tpu_custom_call.1} parent=1 // pred_check_branch
      %3496 = sbr.rel (0) target = $region49
    $region48: #{tpu_custom_call.1} parent=1 // pred_region
      _
    $region49: #{tpu_custom_call.1} parent=1 // pred_fallthru
      _
    %3497 = vsyncpa [#allocation3], 1
    %3498 = vsyncpa [#allocation5], 1
    %3499 = vsyncpa [#allocation8], 1

</llo_original>
